<compile_context>
chip_gen: v5e
topology: v5e:2x2
jax: 0.10.0
libtpu: 0.0.40
codegen_flags: <defaults>
</compile_context>

<pallas_src>
import functools

import jax
import jax.numpy as jnp
from jax.experimental import pallas as pl
from jax.experimental.pallas import tpu as pltpu


_VMEM_LIMIT_BYTES = 48 * 1024 * 1024   # scoped limit we request (safe on v7x 64 MiB/TC)
_VMEM_BUDGET_BYTES = 40 * 1024 * 1024  # working-set target the tiling plan respects


def _round_up(x, m):
    return (x + m - 1) // m * m


def _pad_to(a, shape):
    return jnp.pad(a, [(0, t - s) for s, t in zip(a.shape, shape)])


# ---------------------------------------------------------------------------
# Static tiling plan (all inputs are Python ints derived from shapes)
# ---------------------------------------------------------------------------
def _tile_divisors(np_):
    """Multiples of 128 that divide np_, descending (tile_k candidates)."""
    return [d for d in range(np_, 127, -128) if np_ % d == 0]


def _choose_row_tile(np_):
    """Largest row tile in {512,256,128} dividing np_, keeping >=2 row tiles."""
    for t in (512, 256, 128):
        if np_ % t == 0 and (t <= np_ // 2 or t == 128):
            return t
    return 128


def _plan_k(np_, tile_m, feat_w):
    """Pick (tile_k, feat_resident) for one aggregation pass.

    VMEM working set (bf16, double-buffered where the pipeline does so):
      adjacency tile : 2 * tile_m * tile_k * 2 B
      feature        : 2 * np_ * feat_w * 2 B (resident)   or
                       2 * tile_k * feat_w * 2 B (streamed k-slabs)
      + ~4 MiB slack for bias / W2 / f32 accumulator / output buffers.
    """
    overhead = 4 * 1024 * 1024
    for tk in _tile_divisors(np_):            # prefer resident feature, big tile_k
        if 2 * np_ * feat_w * 2 + 2 * tile_m * tk * 2 + overhead <= _VMEM_BUDGET_BYTES:
            return tk, True
    for tk in _tile_divisors(np_):            # fallback: stream feature per k-slab
        if 2 * tk * feat_w * 2 + 2 * tile_m * tk * 2 + overhead <= _VMEM_BUDGET_BYTES:
            return tk, False
    return 128, False


# ---------------------------------------------------------------------------
# Kernel bodies
# ---------------------------------------------------------------------------
def _feature_kernel(x_ref, w_ref, o_ref):
    """One row tile of XW1 = X @ W1 (bf16 in, f32 MXU accumulate, bf16 out)."""
    o_ref[...] = jnp.dot(
        x_ref[...], w_ref[...], preferred_element_type=jnp.float32
    ).astype(o_ref.dtype)


def _feat_slab(feat_ref, adj_ref):
    """k-slab of the feature operand (in-VMEM slice if resident, else whole block)."""
    tk = adj_ref.shape[1]
    if feat_ref.shape[0] > tk:                 # resident full-height feature
        start = pl.multiple_of(pl.program_id(1) * tk, 128)
        return feat_ref[pl.ds(start, tk), :]
    return feat_ref[...]                       # streamed k-slab


def _agg_layer1_kernel(adj_ref, xw1_ref, b1_ref, w2_ref, hw2_ref, acc_ref):
    """Row tile of HW2 = relu(A_hat @ XW1 + b1) @ W2, reducing over k tiles."""
    k = pl.program_id(1)

    @pl.when(k == 0)
    def _():
        acc_ref[...] = jnp.zeros_like(acc_ref)

    acc_ref[...] += jnp.dot(
        adj_ref[...], _feat_slab(xw1_ref, adj_ref),
        preferred_element_type=jnp.float32)

    @pl.when(k == pl.num_programs(1) - 1)
    def _():
        h = jnp.maximum(acc_ref[...] + b1_ref[...], 0.0)          # bias + ReLU (f32)
        hw2_ref[...] = jnp.dot(
            h.astype(w2_ref.dtype), w2_ref[...],
            preferred_element_type=jnp.float32,
        ).astype(hw2_ref.dtype)


def _agg_layer2_kernel(adj_ref, hw2_ref, b2_ref, z_ref, acc_ref):
    """Row tile of Z = A_hat @ HW2 + b2, reducing over k tiles."""
    k = pl.program_id(1)

    @pl.when(k == 0)
    def _():
        acc_ref[...] = jnp.zeros_like(acc_ref)

    acc_ref[...] += jnp.dot(
        adj_ref[...], _feat_slab(hw2_ref, adj_ref),
        preferred_element_type=jnp.float32)

    @pl.when(k == pl.num_programs(1) - 1)
    def _():
        z_ref[...] = (acc_ref[...] + b2_ref[...]).astype(z_ref.dtype)


# ---------------------------------------------------------------------------
# pallas_call wrappers
# ---------------------------------------------------------------------------
def _feature_transform(x_p, w1_p, *, tile_m):
    np_, cp = x_p.shape
    hp = w1_p.shape[1]
    return pl.pallas_call(
        _feature_kernel,
        out_shape=jax.ShapeDtypeStruct((np_, hp), jnp.bfloat16),
        grid_spec=pltpu.PrefetchScalarGridSpec(
            num_scalar_prefetch=0,
            grid=(np_ // tile_m,),
            in_specs=[
                pl.BlockSpec((tile_m, cp), lambda i: (i, 0)),
                pl.BlockSpec((cp, hp), lambda i: (0, 0)),
            ],
            out_specs=pl.BlockSpec((tile_m, hp), lambda i: (i, 0)),
        ),
        compiler_params=pltpu.CompilerParams(
            dimension_semantics=("parallel",)),
        cost_estimate=pl.CostEstimate(
            flops=2 * np_ * cp * hp,
            transcendentals=0,
            bytes_accessed=2 * (np_ * cp + cp * hp + np_ * hp)),
    )(x_p, w1_p)


def _agg_layer1(adj_p, xw1, b1_p, w2_p, *, tile_m, tile_k, feat_resident):
    np_ = adj_p.shape[0]
    hp = xw1.shape[1]
    op = w2_p.shape[1]
    n_row_tiles = np_ // tile_m
    n_k_tiles = np_ // tile_k
    if feat_resident:   # full-height XW1 kept in VMEM, DMA'd once (index constant)
        feat_spec = pl.BlockSpec((np_, hp), lambda i, k: (0, 0))
        feat_bytes = np_ * hp * 2
    else:               # stream XW1 k-slabs (re-read once per row tile)
        feat_spec = pl.BlockSpec((tile_k, hp), lambda i, k: (k, 0))
        feat_bytes = n_row_tiles * np_ * hp * 2
    return pl.pallas_call(
        _agg_layer1_kernel,
        out_shape=jax.ShapeDtypeStruct((np_, op), jnp.bfloat16),
        grid_spec=pltpu.PrefetchScalarGridSpec(
            num_scalar_prefetch=0,
            grid=(n_row_tiles, n_k_tiles),              # reduction axis last
            in_specs=[
                pl.BlockSpec((tile_m, tile_k), lambda i, k: (i, k)),   # adj (streamed)
                feat_spec,                                             # XW1
                pl.BlockSpec((1, hp), lambda i, k: (0, 0)),            # b1 (resident)
                pl.BlockSpec((hp, op), lambda i, k: (0, 0)),           # W2 (resident)
            ],
            out_specs=pl.BlockSpec((tile_m, op), lambda i, k: (i, 0)),
            scratch_shapes=[pltpu.VMEM((tile_m, hp), jnp.float32)],
        ),
        compiler_params=pltpu.CompilerParams(
            dimension_semantics=("parallel", "arbitrary"),
            vmem_limit_bytes=_VMEM_LIMIT_BYTES),
        cost_estimate=pl.CostEstimate(
            flops=2 * np_ * np_ * hp + 2 * np_ * hp * op,
            transcendentals=0,
            bytes_accessed=np_ * np_ * 2 + feat_bytes + np_ * op * 2 + hp * op * 2),
    )(adj_p, xw1, b1_p, w2_p)


def _agg_layer2(adj_p, hw2, b2_p, *, tile_m, tile_k, feat_resident):
    np_ = adj_p.shape[0]
    op = hw2.shape[1]
    n_row_tiles = np_ // tile_m
    n_k_tiles = np_ // tile_k
    if feat_resident:
        feat_spec = pl.BlockSpec((np_, op), lambda i, k: (0, 0))
        feat_bytes = np_ * op * 2
    else:
        feat_spec = pl.BlockSpec((tile_k, op), lambda i, k: (k, 0))
        feat_bytes = n_row_tiles * np_ * op * 2
    return pl.pallas_call(
        _agg_layer2_kernel,
        out_shape=jax.ShapeDtypeStruct((np_, op), jnp.float32),
        grid_spec=pltpu.PrefetchScalarGridSpec(
            num_scalar_prefetch=0,
            grid=(n_row_tiles, n_k_tiles),              # reduction axis last
            in_specs=[
                pl.BlockSpec((tile_m, tile_k), lambda i, k: (i, k)),   # adj (streamed)
                feat_spec,                                             # HW2
                pl.BlockSpec((1, op), lambda i, k: (0, 0)),            # b2 (resident)
            ],
            out_specs=pl.BlockSpec((tile_m, op), lambda i, k: (i, 0)),
            scratch_shapes=[pltpu.VMEM((tile_m, op), jnp.float32)],
        ),
        compiler_params=pltpu.CompilerParams(
            dimension_semantics=("parallel", "arbitrary"),
            vmem_limit_bytes=_VMEM_LIMIT_BYTES),
        cost_estimate=pl.CostEstimate(
            flops=2 * np_ * np_ * op,
            transcendentals=0,
            bytes_accessed=np_ * np_ * 2 + feat_bytes + np_ * op * 4),
    )(adj_p, hw2, b2_p)


# ---------------------------------------------------------------------------
# Glue: fused, padded, bf16 normalized adjacency (PyG gcn_norm convention)
# ---------------------------------------------------------------------------
def _normalized_adjacency_padded(edge_index, n, np_):
    """A_hat[i, j] = d[i]^-1/2 * d[j]^-1/2 per edge j->i plus self-loops,
    d[k] = 1 + in-degree(k); scattered directly into the zero-padded bf16
    (np_, np_) buffer (single N^2 materialization)."""
    src, dst = edge_index[0], edge_index[1]
    deg = jnp.ones((n,), jnp.float32).at[dst].add(1.0)          # 1 + in-degree
    d_inv_sqrt = jax.lax.rsqrt(deg)                             # deg >= 1 always
    w_edge = (d_inv_sqrt[dst] * d_inv_sqrt[src]).astype(jnp.bfloat16)
    diag = (d_inv_sqrt * d_inv_sqrt).astype(jnp.bfloat16)       # self-loop weight 1/deg
    idx = jnp.arange(n)
    adj = jnp.zeros((np_, np_), jnp.bfloat16)
    adj = adj.at[dst, src].add(w_edge)                          # duplicates accumulate
    adj = adj.at[idx, idx].add(diag)
    return adj


def _normalized_adjacency_f32(edge_index, num_nodes):
    """Reference-only f32 A_hat (matches PyG gcn_norm, flow='source_to_target')."""
    src, dst = edge_index[0], edge_index[1]
    n = num_nodes
    adj = jnp.zeros((n, n), jnp.float32).at[dst, src].add(1.0)
    adj = adj + jnp.eye(n, dtype=jnp.float32)
    deg = adj.sum(axis=1)
    d_inv_sqrt = jnp.where(deg > 0.0, jax.lax.rsqrt(deg), 0.0)
    return adj * d_inv_sqrt[:, None] * d_inv_sqrt[None, :]


# ---------------------------------------------------------------------------
# Encoder forward (GCN / GAE, eval mode)
# ---------------------------------------------------------------------------
@jax.jit
def encoder_forward(x, edge_index, params):
    n, in_c = x.shape
    hidden = params["w1"].shape[1]
    out_c = params["w2"].shape[1]

    # Static tiling plan (shapes are static under jit).  Padding slack on the
    # node dim never exceeds one tile; tile_m keeps >= 2 row tiles so the
    # "parallel" axis can shard across v7x's two TensorCores.
    np_ = _round_up(n, 512) if n > 1024 else _round_up(n, 128)
    cp, hp, op = (_round_up(c, 128) for c in (in_c, hidden, out_c))
    tile_m = _choose_row_tile(np_)
    tk1, res1 = _plan_k(np_, tile_m, hp)
    tk2, res2 = _plan_k(np_, tile_m, op)

    # F.dropout in eval mode is the identity -> nothing to do.
    adj_p = _normalized_adjacency_padded(edge_index, n, np_)     # [Np, Np] bf16

    # Zero padding keeps results numerically exact.
    x_p = _pad_to(x, (np_, cp)).astype(jnp.bfloat16)
    w1_p = _pad_to(params["w1"], (cp, hp)).astype(jnp.bfloat16)
    b1_p = _pad_to(params["b1"].reshape(1, -1), (1, hp)).astype(jnp.float32)
    w2_p = _pad_to(params["w2"], (hp, op)).astype(jnp.bfloat16)
    b2_p = _pad_to(params["b2"].reshape(1, -1), (1, op)).astype(jnp.float32)

    xw1 = _feature_transform(x_p, w1_p, tile_m=tile_m)                  # [Np, Hp] bf16
    # NOTE: padded rows of hw2 hold relu(b1) @ W2 garbage.  This is benign:
    # A_hat's padded columns are zero and the final slice drops padded rows.
    hw2 = _agg_layer1(adj_p, xw1, b1_p, w2_p,
                      tile_m=tile_m, tile_k=tk1, feat_resident=res1)    # [Np, Op] bf16
    z = _agg_layer2(adj_p, hw2, b2_p,
                    tile_m=tile_m, tile_k=tk2, feat_resident=res2)      # [Np, Op] f32
    return z[:n, :out_c]


# ---------------------------------------------------------------------------
# References
# ---------------------------------------------------------------------------
def encoder_reference_bf16(x, edge_index, params):
    """Plain-JAX reference mirroring the kernel's bf16-input / f32-accumulate math."""
    bf16 = jnp.bfloat16
    adj = _normalized_adjacency_f32(edge_index, x.shape[0]).astype(bf16)
    xw1 = jnp.dot(x.astype(bf16), params["w1"].astype(bf16),
                  preferred_element_type=jnp.float32).astype(bf16)
    h = jnp.maximum(
        jnp.dot(adj, xw1, preferred_element_type=jnp.float32) + params["b1"], 0.0)
    hw2 = jnp.dot(h.astype(bf16), params["w2"].astype(bf16),
                  preferred_element_type=jnp.float32).astype(bf16)
    return jnp.dot(adj, hw2, preferred_element_type=jnp.float32) + params["b2"]


def encoder_reference_f32(x, edge_index, params):
    """Full-f32 PyTorch-semantics reference (GCNConv -> ReLU -> GCNConv)."""
    adj = _normalized_adjacency_f32(edge_index, x.shape[0])
    h = jnp.maximum(adj @ (x @ params["w1"]) + params["b1"], 0.0)
    return adj @ (h @ params["w2"]) + params["b2"]


def glorot(key, shape):
    fan_in, fan_out = shape
    limit = jnp.sqrt(6.0 / (fan_in + fan_out))
    return jax.random.uniform(key, shape, jnp.float32, -limit, limit)


if __name__ == "__main__":
    key = jax.random.PRNGKey(0)
    num_nodes = 300            # pads to 384 -> 3 row tiles of 128, single k step
    in_channels = 48
    out_channels = 16
    hidden = 2 * out_channels
    num_edges = 1200

    k_x, k_src, k_off, k_w1, k_b1, k_w2, k_b2 = jax.random.split(key, 7)
    x = jax.random.normal(k_x, (num_nodes, in_channels), jnp.float32)
    src = jax.random.randint(k_src, (num_edges,), 0, num_nodes)
    # no self-loops in the raw edge list (gcn_norm adds them itself)
    dst = (src + jax.random.randint(k_off, (num_edges,), 1, num_nodes)) % num_nodes
    edge_index = jnp.stack([src, dst]).astype(jnp.int32)

    params = {
        "w1": glorot(k_w1, (in_channels, hidden)),
        "b1": 0.1 * jax.random.normal(k_b1, (hidden,), jnp.float32),
        "w2": glorot(k_w2, (hidden, out_channels)),
        "b2": 0.1 * jax.random.normal(k_b2, (out_channels,), jnp.float32),
    }

    z = jax.block_until_ready(encoder_forward(x, edge_index, params))
    z_bf16_ref = encoder_reference_bf16(x, edge_index, params)
    z_f32_ref = encoder_reference_f32(x, edge_index, params)

    assert z.shape == (num_nodes, out_channels)
    err_bf16 = jnp.max(jnp.abs(z - z_bf16_ref))
    assert jnp.allclose(z, z_bf16_ref, atol=2e-2, rtol=2e-2), (
        f"max abs err vs bf16-mirroring ref {err_bf16}")
    # Coarse sanity check against the true f32 GCN model (bf16 operands limit precision).
    err_f32 = jnp.max(jnp.abs(z - z_f32_ref))
    assert jnp.allclose(z, z_f32_ref, atol=2e-1, rtol=2e-1), (
        f"max abs err vs f32 ref {err_f32}")
    print("KERNEL_OK")
</pallas_src>

<mosaic_0001>
module attributes {stable_mosaic.version = 11 : i64} {
  func.func @_feature_kernel(%arg0: i32, %arg1: memref<128x128xbf16, #tpu.memory_space<vmem>>, %arg2: memref<128x128xbf16, #tpu.memory_space<vmem>>, %arg3: memref<128x128xbf16, #tpu.memory_space<vmem>>) attributes {dimension_semantics = [#tpu.dimension_semantics<parallel>], iteration_bounds = array<i64: 3>, scalar_prefetch = 0 : i64, scratch_operands = 0 : i64, tpu.core_type = #tpu.core_type<tc>, window_params = [{transform_indices = @transform_0, window_bounds = array<i64: 128, 128>}, {pipeline_mode = #tpu.pipeline_mode<synchronous>, transform_indices = @transform_1, window_bounds = array<i64: 128, 128>}, {transform_indices = @transform_2, window_bounds = array<i64: 128, 128>}]} {
    %c0 = arith.constant 0 : index
    %c0_0 = arith.constant 0 : index
    %0 = vector.load %arg1[%c0, %c0_0] : memref<128x128xbf16, #tpu.memory_space<vmem>>, vector<128x128xbf16>
    %c0_1 = arith.constant 0 : index
    %c0_2 = arith.constant 0 : index
    %1 = vector.load %arg2[%c0_1, %c0_2] : memref<128x128xbf16, #tpu.memory_space<vmem>>, vector<128x128xbf16>
    %cst = arith.constant dense<0.000000e+00> : vector<128x128xf32>
    %2 = tpu.matmul %0, %1, %cst {dimension_numbers = #tpu.dot_dimension_numbers<[1], [0], [0], [1], [0, 0, 1, 1], [], []>} : vector<128x128xbf16>, vector<128x128xbf16>, vector<128x128xf32> -> vector<128x128xf32>
    %3 = arith.truncf %2 : vector<128x128xf32> to vector<128x128xbf16>
    %c0_3 = arith.constant 0 : index
    %c0_4 = arith.constant 0 : index
    %4 = vector.load %arg3[%c0_3, %c0_4] : memref<128x128xbf16, #tpu.memory_space<vmem>>, vector<128x128xbf16>
    tpu.vector_store %arg3[%c0_3, %c0_4], %3 {strides = array<i32>} : memref<128x128xbf16, #tpu.memory_space<vmem>>, vector<128x128xbf16>,
    return
  }
  func.func @transform_0(%arg0: i32) -> (i32, i32) {
    %c0_i32 = arith.constant 0 : i32
    %c0_i32_0 = arith.constant 0 : i32
    return %arg0, %c0_i32 : i32, i32
  }
  func.func @transform_1(%arg0: i32) -> (i32, i32) {
    %c0_i32 = arith.constant 0 : i32
    %c0_i32_0 = arith.constant 0 : i32
    %c0_i32_1 = arith.constant 0 : i32
    return %c0_i32, %c0_i32_0 : i32, i32
  }
  func.func @transform_2(%arg0: i32) -> (i32, i32) {
    %c0_i32 = arith.constant 0 : i32
    %c0_i32_0 = arith.constant 0 : i32
    return %arg0, %c0_i32 : i32, i32
  }
}

module attributes {stable_mosaic.version = 11 : i64} {
  func.func @_agg_layer1_kernel(%arg0: i32, %arg1: i32, %arg2: memref<128x384xbf16, #tpu.memory_space<vmem>>, %arg3: memref<384x128xbf16, #tpu.memory_space<vmem>>, %arg4: memref<1x128xf32, #tpu.memory_space<vmem>>, %arg5: memref<128x128xbf16, #tpu.memory_space<vmem>>, %arg6: memref<128x128xbf16, #tpu.memory_space<vmem>>, %arg7: memref<128x128xf32, #tpu.memory_space<vmem>>) attributes {dimension_semantics = [#tpu.dimension_semantics<parallel>, #tpu.dimension_semantics<arbitrary>], iteration_bounds = array<i64: 3, 1>, scalar_prefetch = 0 : i64, scratch_operands = 1 : i64, tpu.core_type = #tpu.core_type<tc>, window_params = [{transform_indices = @transform_0, window_bounds = array<i64: 128, 384>}, {pipeline_mode = #tpu.pipeline_mode<synchronous>, transform_indices = @transform_1, window_bounds = array<i64: 384, 128>}, {pipeline_mode = #tpu.pipeline_mode<synchronous>, transform_indices = @transform_2, window_bounds = array<i64: 1, 128>}, {pipeline_mode = #tpu.pipeline_mode<synchronous>, transform_indices = @transform_3, window_bounds = array<i64: 128, 128>}, {transform_indices = @transform_4, window_bounds = array<i64: 128, 128>}]} {
    %c0_i32 = arith.constant 0 : i32
    %0 = arith.cmpi eq, %arg1, %c0_i32 : i32
    %1 = arith.extui %0 : i1 to i32
    %c0_i32_0 = arith.constant 0 : i32
    %2 = arith.cmpi ne, %1, %c0_i32_0 : i32
    scf.if %2 {
      %cst_10 = arith.constant 0.000000e+00 : f32
      %12 = vector.broadcast %cst_10 : f32 to vector<128x128xf32>
      %c0_11 = arith.constant 0 : index
      %c0_12 = arith.constant 0 : index
      %13 = vector.load %arg7[%c0_11, %c0_12] : memref<128x128xf32, #tpu.memory_space<vmem>>, vector<128x128xf32>
      tpu.vector_store %arg7[%c0_11, %c0_12], %12 {strides = array<i32>} : memref<128x128xf32, #tpu.memory_space<vmem>>, vector<128x128xf32>,
    } else {
    }
    %c0 = arith.constant 0 : index
    %c0_1 = arith.constant 0 : index
    %3 = vector.load %arg7[%c0, %c0_1] : memref<128x128xf32, #tpu.memory_space<vmem>>, vector<128x128xf32>
    %c0_2 = arith.constant 0 : index
    %c0_3 = arith.constant 0 : index
    %4 = vector.load %arg2[%c0_2, %c0_3] : memref<128x384xbf16, #tpu.memory_space<vmem>>, vector<128x384xbf16>
    %c0_4 = arith.constant 0 : index
    %c0_5 = arith.constant 0 : index
    %5 = vector.load %arg3[%c0_4, %c0_5] : memref<384x128xbf16, #tpu.memory_space<vmem>>, vector<384x128xbf16>
    %cst = arith.constant dense<0.000000e+00> : vector<128x128xf32>
    %6 = tpu.matmul %4, %5, %cst {dimension_numbers = #tpu.dot_dimension_numbers<[1], [0], [0], [1], [0, 0, 1, 1], [], []>} : vector<128x384xbf16>, vector<384x128xbf16>, vector<128x128xf32> -> vector<128x128xf32>
    %7 = arith.addf %3, %6 : vector<128x128xf32>
    %c0_6 = arith.constant 0 : index
    %c0_7 = arith.constant 0 : index
    %8 = vector.load %arg7[%c0_6, %c0_7] : memref<128x128xf32, #tpu.memory_space<vmem>>, vector<128x128xf32>
    tpu.vector_store %arg7[%c0_6, %c0_7], %7 {strides = array<i32>} : memref<128x128xf32, #tpu.memory_space<vmem>>, vector<128x128xf32>,
    %c0_i32_8 = arith.constant 0 : i32
    %9 = arith.cmpi eq, %arg1, %c0_i32_8 : i32
    %10 = arith.extui %9 : i1 to i32
    %c0_i32_9 = arith.constant 0 : i32
    %11 = arith.cmpi ne, %10, %c0_i32_9 : i32
    scf.if %11 {
      %c0_10 = arith.constant 0 : index
      %c0_11 = arith.constant 0 : index
      %12 = vector.load %arg7[%c0_10, %c0_11] : memref<128x128xf32, #tpu.memory_space<vmem>>, vector<128x128xf32>
      %c0_12 = arith.constant 0 : index
      %c0_13 = arith.constant 0 : index
      %13 = vector.load %arg4[%c0_12, %c0_13] : memref<1x128xf32, #tpu.memory_space<vmem>>, vector<1x128xf32>
      %14 = vector.broadcast %13 : vector<1x128xf32> to vector<128x128xf32>
      %15 = arith.addf %12, %14 : vector<128x128xf32>
      %cst_14 = arith.constant 0.000000e+00 : f32
      %16 = vector.broadcast %cst_14 : f32 to vector<128x128xf32>
      %17 = arith.maximumf %15, %16 : vector<128x128xf32>
      %18 = arith.truncf %17 : vector<128x128xf32> to vector<128x128xbf16>
      %c0_15 = arith.constant 0 : index
      %c0_16 = arith.constant 0 : index
      %19 = vector.load %arg5[%c0_15, %c0_16] : memref<128x128xbf16, #tpu.memory_space<vmem>>, vector<128x128xbf16>
      %cst_17 = arith.constant dense<0.000000e+00> : vector<128x128xf32>
      %20 = tpu.matmul %18, %19, %cst_17 {dimension_numbers = #tpu.dot_dimension_numbers<[1], [0], [0], [1], [0, 0, 1, 1], [], []>} : vector<128x128xbf16>, vector<128x128xbf16>, vector<128x128xf32> -> vector<128x128xf32>
      %21 = arith.truncf %20 : vector<128x128xf32> to vector<128x128xbf16>
      %c0_18 = arith.constant 0 : index
      %c0_19 = arith.constant 0 : index
      %22 = vector.load %arg6[%c0_18, %c0_19] : memref<128x128xbf16, #tpu.memory_space<vmem>>, vector<128x128xbf16>
      tpu.vector_store %arg6[%c0_18, %c0_19], %21 {strides = array<i32>} : memref<128x128xbf16, #tpu.memory_space<vmem>>, vector<128x128xbf16>,
    } else {
    }
    return
  }
  func.func @transform_0(%arg0: i32, %arg1: i32) -> (i32, i32) {
    %c0_i32 = arith.constant 0 : i32
    return %arg0, %arg1 : i32, i32
  }
  func.func @transform_1(%arg0: i32, %arg1: i32) -> (i32, i32) {
    %c0_i32 = arith.constant 0 : i32
    %c0_i32_0 = arith.constant 0 : i32
    %c0_i32_1 = arith.constant 0 : i32
    return %c0_i32, %c0_i32_0 : i32, i32
  }
  func.func @transform_2(%arg0: i32, %arg1: i32) -> (i32, i32) {
    %c0_i32 = arith.constant 0 : i32
    %c0_i32_0 = arith.constant 0 : i32
    %c0_i32_1 = arith.constant 0 : i32
    return %c0_i32, %c0_i32_0 : i32, i32
  }
  func.func @transform_3(%arg0: i32, %arg1: i32) -> (i32, i32) {
    %c0_i32 = arith.constant 0 : i32
    %c0_i32_0 = arith.constant 0 : i32
    %c0_i32_1 = arith.constant 0 : i32
    return %c0_i32, %c0_i32_0 : i32, i32
  }
  func.func @transform_4(%arg0: i32, %arg1: i32) -> (i32, i32) {
    %c0_i32 = arith.constant 0 : i32
    %c0_i32_0 = arith.constant 0 : i32
    return %arg0, %c0_i32 : i32, i32
  }
}

module attributes {stable_mosaic.version = 11 : i64} {
  func.func @_agg_layer2_kernel(%arg0: i32, %arg1: i32, %arg2: memref<128x384xbf16, #tpu.memory_space<vmem>>, %arg3: memref<384x128xbf16, #tpu.memory_space<vmem>>, %arg4: memref<1x128xf32, #tpu.memory_space<vmem>>, %arg5: memref<128x128xf32, #tpu.memory_space<vmem>>, %arg6: memref<128x128xf32, #tpu.memory_space<vmem>>) attributes {dimension_semantics = [#tpu.dimension_semantics<parallel>, #tpu.dimension_semantics<arbitrary>], iteration_bounds = array<i64: 3, 1>, scalar_prefetch = 0 : i64, scratch_operands = 1 : i64, tpu.core_type = #tpu.core_type<tc>, window_params = [{transform_indices = @transform_0, window_bounds = array<i64: 128, 384>}, {pipeline_mode = #tpu.pipeline_mode<synchronous>, transform_indices = @transform_1, window_bounds = array<i64: 384, 128>}, {pipeline_mode = #tpu.pipeline_mode<synchronous>, transform_indices = @transform_2, window_bounds = array<i64: 1, 128>}, {transform_indices = @transform_3, window_bounds = array<i64: 128, 128>}]} {
    %c0_i32 = arith.constant 0 : i32
    %0 = arith.cmpi eq, %arg1, %c0_i32 : i32
    %1 = arith.extui %0 : i1 to i32
    %c0_i32_0 = arith.constant 0 : i32
    %2 = arith.cmpi ne, %1, %c0_i32_0 : i32
    scf.if %2 {
      %cst_10 = arith.constant 0.000000e+00 : f32
      %12 = vector.broadcast %cst_10 : f32 to vector<128x128xf32>
      %c0_11 = arith.constant 0 : index
      %c0_12 = arith.constant 0 : index
      %13 = vector.load %arg6[%c0_11, %c0_12] : memref<128x128xf32, #tpu.memory_space<vmem>>, vector<128x128xf32>
      tpu.vector_store %arg6[%c0_11, %c0_12], %12 {strides = array<i32>} : memref<128x128xf32, #tpu.memory_space<vmem>>, vector<128x128xf32>,
    } else {
    }
    %c0 = arith.constant 0 : index
    %c0_1 = arith.constant 0 : index
    %3 = vector.load %arg6[%c0, %c0_1] : memref<128x128xf32, #tpu.memory_space<vmem>>, vector<128x128xf32>
    %c0_2 = arith.constant 0 : index
    %c0_3 = arith.constant 0 : index
    %4 = vector.load %arg2[%c0_2, %c0_3] : memref<128x384xbf16, #tpu.memory_space<vmem>>, vector<128x384xbf16>
    %c0_4 = arith.constant 0 : index
    %c0_5 = arith.constant 0 : index
    %5 = vector.load %arg3[%c0_4, %c0_5] : memref<384x128xbf16, #tpu.memory_space<vmem>>, vector<384x128xbf16>
    %cst = arith.constant dense<0.000000e+00> : vector<128x128xf32>
    %6 = tpu.matmul %4, %5, %cst {dimension_numbers = #tpu.dot_dimension_numbers<[1], [0], [0], [1], [0, 0, 1, 1], [], []>} : vector<128x384xbf16>, vector<384x128xbf16>, vector<128x128xf32> -> vector<128x128xf32>
    %7 = arith.addf %3, %6 : vector<128x128xf32>
    %c0_6 = arith.constant 0 : index
    %c0_7 = arith.constant 0 : index
    %8 = vector.load %arg6[%c0_6, %c0_7] : memref<128x128xf32, #tpu.memory_space<vmem>>, vector<128x128xf32>
    tpu.vector_store %arg6[%c0_6, %c0_7], %7 {strides = array<i32>} : memref<128x128xf32, #tpu.memory_space<vmem>>, vector<128x128xf32>,
    %c0_i32_8 = arith.constant 0 : i32
    %9 = arith.cmpi eq, %arg1, %c0_i32_8 : i32
    %10 = arith.extui %9 : i1 to i32
    %c0_i32_9 = arith.constant 0 : i32
    %11 = arith.cmpi ne, %10, %c0_i32_9 : i32
    scf.if %11 {
      %c0_10 = arith.constant 0 : index
      %c0_11 = arith.constant 0 : index
      %12 = vector.load %arg6[%c0_10, %c0_11] : memref<128x128xf32, #tpu.memory_space<vmem>>, vector<128x128xf32>
      %c0_12 = arith.constant 0 : index
      %c0_13 = arith.constant 0 : index
      %13 = vector.load %arg4[%c0_12, %c0_13] : memref<1x128xf32, #tpu.memory_space<vmem>>, vector<1x128xf32>
      %14 = vector.broadcast %13 : vector<1x128xf32> to vector<128x128xf32>
      %15 = arith.addf %12, %14 : vector<128x128xf32>
      %c0_14 = arith.constant 0 : index
      %c0_15 = arith.constant 0 : index
      %16 = vector.load %arg5[%c0_14, %c0_15] : memref<128x128xf32, #tpu.memory_space<vmem>>, vector<128x128xf32>
      tpu.vector_store %arg5[%c0_14, %c0_15], %15 {strides = array<i32>} : memref<128x128xf32, #tpu.memory_space<vmem>>, vector<128x128xf32>,
    } else {
    }
    return
  }
  func.func @transform_0(%arg0: i32, %arg1: i32) -> (i32, i32) {
    %c0_i32 = arith.constant 0 : i32
    return %arg0, %arg1 : i32, i32
  }
  func.func @transform_1(%arg0: i32, %arg1: i32) -> (i32, i32) {
    %c0_i32 = arith.constant 0 : i32
    %c0_i32_0 = arith.constant 0 : i32
    %c0_i32_1 = arith.constant 0 : i32
    return %c0_i32, %c0_i32_0 : i32, i32
  }
  func.func @transform_2(%arg0: i32, %arg1: i32) -> (i32, i32) {
    %c0_i32 = arith.constant 0 : i32
    %c0_i32_0 = arith.constant 0 : i32
    %c0_i32_1 = arith.constant 0 : i32
    return %c0_i32, %c0_i32_0 : i32, i32
  }
  func.func @transform_3(%arg0: i32, %arg1: i32) -> (i32, i32) {
    %c0_i32 = arith.constant 0 : i32
    %c0_i32_0 = arith.constant 0 : i32
    return %arg0, %c0_i32 : i32, i32
  }
}

</mosaic_0001>

<llo_original>
// kernel: encoder_forward.3
$region0: #{encoder_forward.3}
  #allocation0 [shape = 'u32[]', space=smem, size = 0x4, offset = 0x4, fixed_abs, tag = 'smem constant byte address 0x4 - core index']
  #allocation1 [shape = 'u32[72,128]{1,0:T(1,128)}', space=vmem, size = 0x9000, scoped, tag = 'internal scratch']
  %s0 = inlined_call_operand.vmem [shape: bf16[384,128], index: 0, kind: input, shape index: {}]
  %s1 = inlined_call_operand.vmem [shape: bf16[128,128], index: 1, kind: input, shape index: {}]
  %s2 = inlined_call_operand.vmem [shape: bf16[384,128], index: 2, kind: output, shape index: {}]
  %s3 = sld [smem:[#allocation0]]
  $region41: #{encoder_forward.3} parent=0
    _
  %s5 = ssub.s32 1, %s3
  %s6 = scalar_select 0, %s5, %s3
  loop: start=0, step=1, limit=5
  $region2: #{encoder_forward.3} parent=0 // loop_pre_header
    _
  $region3: #{encoder_forward.3} parent=0 // loop_header
    %s8 = sphi 0, %s12
    %p9 = scmp.ge.s32.totalorder %s8, 5
    %s18 = sphi 0, %s20
    %s21 = sphi 0, %s18
    %s22 = sphi 0, %s21
    %s38 = sphi 0, %s22
    %s42 = sphi 0, %s42
    %s44 = sphi 0, %s42
    %s45 = sphi 0, %s44
    %s59 = sphi 0, %s45
    %s65 = sphi 0, %s67
    %s68 = sphi 0, %s65
    %s69 = sphi 0, %s68
    %s85 = sphi 0, %s69
  $region4: #{encoder_forward.3} parent=0 // loop_header_branch
    %11 = sbr.rel (%p9) target = $region8
  $region5: #{encoder_forward.3} parent=0 // loop_body
    %s13 = ssub.s32 %s8, 1
    %s14 = ssub.s32 %s8, 2
    %s15 = sadd.s32 %s8, 1
    %s16 = ssub.s32 %s8, %s15
    %p17 = scmp.eq.s32.totalorder %s16, 0
    %s19 = sadd.s32 %s18, 1
    %s20 = scalar_select %p17, %s18, %s19
    %p23 = pneg %p17
    %p24 = scmp.eq.s32.totalorder %s8, 2
    %p25 = por %p23, %p24
    %p26 = scmp.ne.s32.totalorder %s18, %s21
    %p27 = scmp.eq.s32.totalorder %s8, 0
    %p28 = por %p26, %p27
    %p29 = scmp.ne.s32.totalorder %s18, %s21
    %p30 = scmp.eq.s32.totalorder %s13, 2
    %p31 = por %p29, %p30
    %p32 = scmp.ne.s32.totalorder %s21, %s22
    %p33 = scmp.eq.s32.totalorder %s13, 0
    %p34 = por %p32, %p33
    %p35 = scmp.ne.s32.totalorder %s21, %s22
    %p36 = scmp.eq.s32.totalorder %s14, 2
    %p37 = por %p35, %p36
    %p39 = scmp.ne.s32.totalorder %s22, %s38
    %p40 = scmp.eq.s32.totalorder %s14, 0
    %p41 = por %p39, %p40
    %s43 = sadd.s32 %s42, 1
    %p46 = scmp.eq.s32.totalorder %s8, 2
    %p47 = scmp.ne.s32.totalorder %s42, %s44
    %p48 = scmp.eq.s32.totalorder %s8, 0
    %p49 = por %p47, %p48
    %p50 = scmp.ne.s32.totalorder %s42, %s44
    %p51 = scmp.eq.s32.totalorder %s13, 2
    %p52 = por %p50, %p51
    %p53 = scmp.ne.s32.totalorder %s44, %s45
    %p54 = scmp.eq.s32.totalorder %s13, 0
    %p55 = por %p53, %p54
    %p56 = scmp.ne.s32.totalorder %s44, %s45
    %p57 = scmp.eq.s32.totalorder %s14, 2
    %p58 = por %p56, %p57
    %p60 = scmp.ne.s32.totalorder %s45, %s59
    %p61 = scmp.eq.s32.totalorder %s14, 0
    %p62 = por %p60, %p61
    %s63 = ssub.s32 %s8, %s15
    %p64 = scmp.eq.s32.totalorder %s63, 0
    %s66 = sadd.s32 %s65, 1
    %s67 = scalar_select %p64, %s65, %s66
    %p70 = pneg %p64
    %p71 = scmp.eq.s32.totalorder %s8, 2
    %p72 = por %p70, %p71
    %p73 = scmp.ne.s32.totalorder %s65, %s68
    %p74 = scmp.eq.s32.totalorder %s8, 0
    %p75 = por %p73, %p74
    %p76 = scmp.ne.s32.totalorder %s65, %s68
    %p77 = scmp.eq.s32.totalorder %s13, 2
    %p78 = por %p76, %p77
    %p79 = scmp.ne.s32.totalorder %s68, %s69
    %p80 = scmp.eq.s32.totalorder %s13, 0
    %p81 = por %p79, %p80
    %p82 = scmp.ne.s32.totalorder %s68, %s69
    %p83 = scmp.eq.s32.totalorder %s14, 2
    %p84 = por %p82, %p83
    %p86 = scmp.ne.s32.totalorder %s69, %s85
    %p87 = scmp.eq.s32.totalorder %s14, 0
    %p88 = por %p86, %p87
    %p89 = scmp.le.s32.totalorder 1, %s8
    %p90 = scmp.lt.s32.totalorder %s8, 4
    %p91 = pnand %p89, %p90
    %p92 = pneg %p91
    // Predicated region
    $region9: #{encoder_forward.3} parent=5 // pred_check
      _
    $region10: #{encoder_forward.3} parent=5 // pred_check_branch
      %94 = sbr.rel (%p91) target = $region12
    $region11: #{encoder_forward.3} parent=5 // pred_region
      %s95 = ssub.s32 %s8, 1
      // Predicated region
      $region13: #{encoder_forward.3} parent=11 // pred_check
        %p96 = pneg %p55
      $region14: #{encoder_forward.3} parent=11 // pred_check_branch
        %98 = sbr.rel (%p96) target = $region16
      $region15: #{encoder_forward.3} parent=11 // pred_region
        _
      $region16: #{encoder_forward.3} parent=11 // pred_fallthru
        _
    $region12: #{encoder_forward.3} parent=5 // pred_fallthru
      _
    %p99 = scmp.lt.s32.totalorder %s8, 3
    // Predicated region
    $region17: #{encoder_forward.3} parent=5 // pred_check
      %p100 = pneg %p99
    $region18: #{encoder_forward.3} parent=5 // pred_check_branch
      %102 = sbr.rel (%p100) target = $region20
    $region19: #{encoder_forward.3} parent=5 // pred_region
      // Predicated region
      $region21: #{encoder_forward.3} parent=19 // pred_check
        %p103 = pneg %p28
      $region22: #{encoder_forward.3} parent=19 // pred_check_branch
        %105 = sbr.rel (%p103) target = $region24
      $region23: #{encoder_forward.3} parent=19 // pred_region
        %s106 = smul.u32 16, %s8
        %p107 = scmp.lt.s32.totalorder %s106, 47
        %s108 = scalar_select %p107, %s106, 47
        %s109 = smul.addr %s108, 4
        %s110 = scalar_lea.vmem %s0, %s109
        %s111 = smul.u32 16, %s8
      $region24: #{encoder_forward.3} parent=19 // pred_fallthru
        _
    $region20: #{encoder_forward.3} parent=5 // pred_fallthru
      _
    %p112 = scmp.le.s32.totalorder 1, %s8
    %p113 = scmp.lt.s32.totalorder %s8, 4
    %p114 = pnand %p112, %p113
    %p115 = pneg %p114
    // Predicated region
    $region25: #{encoder_forward.3} parent=5 // pred_check
      _
    $region26: #{encoder_forward.3} parent=5 // pred_check_branch
      %117 = sbr.rel (%p114) target = $region28
    $region27: #{encoder_forward.3} parent=5 // pred_region
      %s118 = ssub.s32 %s8, 1
      %s119 = smul.u32 16, %s13
      %p120 = scmp.lt.s32.totalorder %s119, 47
      %s121 = scalar_select %p120, %s119, 47
      %s122 = smul.addr %s121, 4
      %s123 = scalar_lea.vmem %s0, %s122
      %p124 = pneg %p34
      %p125 = pneg %p31
      %p126 = pneg %p55
      %p127 = pneg %p52
      %p128 = pneg %p81
      %p129 = pneg %p78
      %s130 = smul.u32 16, %s13
      %p131 = scmp.lt.s32.totalorder %s130, 47
      %s132 = scalar_select %p131, %s130, 47
      %s133 = smul.addr %s132, 4
      %s134 = scalar_lea.vmem %s2, %s133
      %s135 = smul.u32 16, %s13
      %p136 = scmp.lt.s32.totalorder %s135, 47
      %s137 = scalar_select %p136, %s135, 47
      %s138 = smul.addr %s137, 4
      %s139 = scalar_lea.vmem %s0, %s138
      %s140 = smul.u32 16, %s13
      %s141 = smul.u32 16, %s13
      %p142 = scmp.lt.s32.totalorder %s141, 47
      %s143 = scalar_select %p142, %s141, 47
      %s144 = smul.addr %s143, 4
      %s145 = scalar_lea.vmem %s2, %s144
      %s146 = smul.u32 16, %s13
      %v147 = vld [vmem:[%s139] sm:$0xf]
      %v148 = vld [vmem:[%s139 + $0x4] sm:$0xf]
      %v149 = vld [vmem:[%s139 + $0x8] sm:$0xf]
      %v150 = vld [vmem:[%s139 + $0xc] sm:$0xf]
      %v151 = vld [vmem:[%s139 + $0x10] sm:$0xf]
      %v152 = vld [vmem:[%s139 + $0x14] sm:$0xf]
      %v153 = vld [vmem:[%s139 + $0x18] sm:$0xf]
      %v154 = vld [vmem:[%s139 + $0x1c] sm:$0xf]
      %v155 = vld [vmem:[%s139 + $0x20] sm:$0xf]
      %v156 = vld [vmem:[%s139 + $0x24] sm:$0xf]
      %v157 = vld [vmem:[%s139 + $0x28] sm:$0xf]
      %v158 = vld [vmem:[%s139 + $0x2c] sm:$0xf]
      %v159 = vld [vmem:[%s139 + $0x30] sm:$0xf]
      %v160 = vld [vmem:[%s139 + $0x34] sm:$0xf]
      %v161 = vld [vmem:[%s139 + $0x38] sm:$0xf]
      %v162 = vld [vmem:[%s139 + $0x3c] sm:$0xf]
      %v163 = vld [vmem:[%s1] sm:$0xf]
      %v164 = vld [vmem:[%s1 + $0x4] sm:$0xf]
      %v165 = vld [vmem:[%s1 + $0x8] sm:$0xf]
      %v166 = vld [vmem:[%s1 + $0xc] sm:$0xf]
      %v167 = vld [vmem:[%s1 + $0x10] sm:$0xf]
      %v168 = vld [vmem:[%s1 + $0x14] sm:$0xf]
      %v169 = vld [vmem:[%s1 + $0x18] sm:$0xf]
      %v170 = vld [vmem:[%s1 + $0x1c] sm:$0xf]
      %v171 = vld [vmem:[%s1 + $0x20] sm:$0xf]
      %v172 = vld [vmem:[%s1 + $0x24] sm:$0xf]
      %v173 = vld [vmem:[%s1 + $0x28] sm:$0xf]
      %v174 = vld [vmem:[%s1 + $0x2c] sm:$0xf]
      %v175 = vld [vmem:[%s1 + $0x30] sm:$0xf]
      %v176 = vld [vmem:[%s1 + $0x34] sm:$0xf]
      %v177 = vld [vmem:[%s1 + $0x38] sm:$0xf]
      %v178 = vld [vmem:[%s1 + $0x3c] sm:$0xf]
      %v195 = vunpack.c.l.b16 %v147
      %v196 = vunpack.c.l.b16 %v148
      %v197 = vunpack.c.l.b16 %v149
      %v198 = vunpack.c.l.b16 %v150
      %v199 = vunpack.c.l.b16 %v151
      %v200 = vunpack.c.l.b16 %v152
      %v201 = vunpack.c.l.b16 %v153
      %v202 = vunpack.c.l.b16 %v154
      %v203 = vunpack.c.l.b16 %v155
      %v204 = vunpack.c.l.b16 %v156
      %v205 = vunpack.c.l.b16 %v157
      %v206 = vunpack.c.l.b16 %v158
      %v207 = vunpack.c.l.b16 %v159
      %v208 = vunpack.c.l.b16 %v160
      %v209 = vunpack.c.l.b16 %v161
      %v210 = vunpack.c.l.b16 %v162
      %v211 = vpack.c.b16 %v196, %v195
      %v212 = vpack.c.b16 %v198, %v197
      %v213 = vpack.c.b16 %v200, %v199
      %v214 = vpack.c.b16 %v202, %v201
      %v215 = vpack.c.b16 %v204, %v203
      %v216 = vpack.c.b16 %v206, %v205
      %v217 = vpack.c.b16 %v208, %v207
      %v218 = vpack.c.b16 %v210, %v209
      %v243 = vunpack.c.l.b16 %v163
      %v244 = vunpack.c.l.b16 %v164
      %v245 = vunpack.c.l.b16 %v165
      %v246 = vunpack.c.l.b16 %v166
      %v247 = vunpack.c.l.b16 %v167
      %v248 = vunpack.c.l.b16 %v168
      %v249 = vunpack.c.l.b16 %v169
      %v250 = vunpack.c.l.b16 %v170
      %v251 = vunpack.c.l.b16 %v171
      %v252 = vunpack.c.l.b16 %v172
      %v253 = vunpack.c.l.b16 %v173
      %v254 = vunpack.c.l.b16 %v174
      %v255 = vunpack.c.l.b16 %v175
      %v256 = vunpack.c.l.b16 %v176
      %v257 = vunpack.c.l.b16 %v177
      %v258 = vunpack.c.l.b16 %v178
      %v259 = vpack.c.b16 %v244, %v243
      %v260 = vpack.c.b16 %v246, %v245
      %v261 = vpack.c.b16 %v248, %v247
      %v262 = vpack.c.b16 %v250, %v249
      %v263 = vpack.c.b16 %v252, %v251
      %v264 = vpack.c.b16 %v254, %v253
      %v265 = vpack.c.b16 %v256, %v255
      %v266 = vpack.c.b16 %v258, %v257
      %275 = vmatpush.bf16.msra.mxu0 %v266
      %276 = vmatpush.bf16.msra.mxu0 %v265
      %277 = vmatpush.bf16.msra.mxu0 %v264
      %278 = vmatpush.bf16.msra.mxu0 %v263
      %279 = vmatpush.bf16.msra.mxu0 %v262
      %280 = vmatpush.bf16.msra.mxu0 %v261
      %281 = vmatpush.bf16.msra.mxu0 %v260
      %282 = vmatpush.bf16.msra.mxu0 %v259
      %283 = vmatmul.bf16.gmra.mxu0 %v211
      %v284 = vpop.f32.mrf.mxu0
      %v285 = vadd.f32 0.0, %v284
      %v286 = vpop.f32.mrf.mxu0
      %v287 = vadd.f32 0.0, %v286
      %288 = vmatmul.bf16.gmra.mxu0 %v212
      %v289 = vpop.f32.mrf.mxu0
      %v290 = vadd.f32 0.0, %v289
      %v291 = vpop.f32.mrf.mxu0
      %v292 = vadd.f32 0.0, %v291
      %293 = vmatmul.bf16.gmra.mxu0 %v213
      %v294 = vpop.f32.mrf.mxu0
      %v295 = vadd.f32 0.0, %v294
      %v296 = vpop.f32.mrf.mxu0
      %v297 = vadd.f32 0.0, %v296
      %298 = vmatmul.bf16.gmra.mxu0 %v214
      %v299 = vpop.f32.mrf.mxu0
      %v300 = vadd.f32 0.0, %v299
      %v301 = vpop.f32.mrf.mxu0
      %v302 = vadd.f32 0.0, %v301
      %303 = vmatmul.bf16.gmra.mxu0 %v215
      %v304 = vpop.f32.mrf.mxu0
      %v305 = vadd.f32 0.0, %v304
      %v306 = vpop.f32.mrf.mxu0
      %v307 = vadd.f32 0.0, %v306
      %308 = vmatmul.bf16.gmra.mxu0 %v216
      %v309 = vpop.f32.mrf.mxu0
      %v310 = vadd.f32 0.0, %v309
      %v311 = vpop.f32.mrf.mxu0
      %v312 = vadd.f32 0.0, %v311
      %313 = vmatmul.bf16.gmra.mxu0 %v217
      %v314 = vpop.f32.mrf.mxu0
      %v315 = vadd.f32 0.0, %v314
      %v316 = vpop.f32.mrf.mxu0
      %v317 = vadd.f32 0.0, %v316
      %318 = vmatmul.bf16.gmra.mxu0 %v218
      %v319 = vpop.f32.mrf.mxu0
      %v320 = vadd.f32 0.0, %v319
      %v321 = vpop.f32.mrf.mxu0
      %v322 = vadd.f32 0.0, %v321
      %323 = vdwg.mxu0
      %v324 = vpack.c.bf16 %v285, %v285
      %v325 = vpack.c.bf16 %v287, %v287
      %v326 = vpack.c.bf16 %v290, %v290
      %v327 = vpack.c.bf16 %v292, %v292
      %v328 = vpack.c.bf16 %v295, %v295
      %v329 = vpack.c.bf16 %v297, %v297
      %v330 = vpack.c.bf16 %v300, %v300
      %v331 = vpack.c.bf16 %v302, %v302
      %v332 = vpack.c.bf16 %v305, %v305
      %v333 = vpack.c.bf16 %v307, %v307
      %v334 = vpack.c.bf16 %v310, %v310
      %v335 = vpack.c.bf16 %v312, %v312
      %v336 = vpack.c.bf16 %v315, %v315
      %v337 = vpack.c.bf16 %v317, %v317
      %v338 = vpack.c.bf16 %v320, %v320
      %v339 = vpack.c.bf16 %v322, %v322
      %340 = vst [vmem:[%s145] sm:$0xf] %v324
      %341 = vst [vmem:[%s145 + $0x4] sm:$0xf] %v325
      %342 = vst [vmem:[%s145 + $0x8] sm:$0xf] %v326
      %343 = vst [vmem:[%s145 + $0xc] sm:$0xf] %v327
      %344 = vst [vmem:[%s145 + $0x10] sm:$0xf] %v328
      %345 = vst [vmem:[%s145 + $0x14] sm:$0xf] %v329
      %346 = vst [vmem:[%s145 + $0x18] sm:$0xf] %v330
      %347 = vst [vmem:[%s145 + $0x1c] sm:$0xf] %v331
      %348 = vst [vmem:[%s145 + $0x20] sm:$0xf] %v332
      %349 = vst [vmem:[%s145 + $0x24] sm:$0xf] %v333
      %350 = vst [vmem:[%s145 + $0x28] sm:$0xf] %v334
      %351 = vst [vmem:[%s145 + $0x2c] sm:$0xf] %v335
      %352 = vst [vmem:[%s145 + $0x30] sm:$0xf] %v336
      %353 = vst [vmem:[%s145 + $0x34] sm:$0xf] %v337
      %354 = vst [vmem:[%s145 + $0x38] sm:$0xf] %v338
      %355 = vst [vmem:[%s145 + $0x3c] sm:$0xf] %v339
      %s356 = smul.u32 16, %s13
      %p357 = scmp.lt.s32.totalorder %s356, 47
      %s358 = scalar_select %p357, %s356, 47
      %s359 = smul.addr %s358, 4
      %s360 = scalar_lea.vmem %s2, %s359
      // Predicated region
      $region29: #{encoder_forward.3} parent=27 // pred_check
        %p361 = pneg %p78
      $region30: #{encoder_forward.3} parent=27 // pred_check_branch
        %363 = sbr.rel (%p361) target = $region32
      $region31: #{encoder_forward.3} parent=27 // pred_region
        %s364 = smul.u32 16, %s13
      $region32: #{encoder_forward.3} parent=27 // pred_fallthru
        _
    $region28: #{encoder_forward.3} parent=5 // pred_fallthru
      _
    %p365 = scmp.le.s32.totalorder 2, %s8
    // Predicated region
    $region33: #{encoder_forward.3} parent=5 // pred_check
      %p366 = pneg %p365
    $region34: #{encoder_forward.3} parent=5 // pred_check_branch
      %368 = sbr.rel (%p366) target = $region36
    $region35: #{encoder_forward.3} parent=5 // pred_region
      %s369 = ssub.s32 %s8, 2
      // Predicated region
      $region37: #{encoder_forward.3} parent=35 // pred_check
        %p370 = pneg %p84
      $region38: #{encoder_forward.3} parent=35 // pred_check_branch
        %372 = sbr.rel (%p370) target = $region40
      $region39: #{encoder_forward.3} parent=35 // pred_region
        %s373 = smul.u32 16, %s14
        %p374 = scmp.lt.s32.totalorder %s373, 47
        %s375 = scalar_select %p374, %s373, 47
        %s376 = smul.addr %s375, 4
        %s377 = scalar_lea.vmem %s2, %s376
      $region40: #{encoder_forward.3} parent=35 // pred_fallthru
        _
    $region36: #{encoder_forward.3} parent=5 // pred_fallthru
      _
  $region6: #{encoder_forward.3} parent=0 // loop_footer
    %s12 = sadd.s32 1, %s8
  $region7: #{encoder_forward.3} parent=0 // loop_footer_branch
    %7 = sbr.rel target = $region3
  $region8: #{encoder_forward.3} parent=0 // loop_exit
    _

// kernel: encoder_forward.4
$region0: #{encoder_forward.4}
  #allocation0 [shape = 'u32[]', space=smem, size = 0x4, offset = 0x4, fixed_abs, tag = 'smem constant byte address 0x4 - core index']
  #allocation1 [shape = 'u32[72,128]{1,0:T(1,128)}', space=vmem, size = 0x9000, scoped, tag = 'internal scratch']
  #allocation2 [shape = 'f32[128,128]{1,0:T(8,128)}', space=vmem, size = 0x10000, scoped, tag = 'scratch operand']
  %s0 = inlined_call_operand.vmem [shape: bf16[384,384], index: 0, kind: input, shape index: {}]
  %s1 = inlined_call_operand.vmem [shape: bf16[384,128], index: 1, kind: input, shape index: {}]
  %s2 = inlined_call_operand.vmem [shape: f32[1,128], index: 2, kind: input, shape index: {}]
  %s3 = inlined_call_operand.vmem [shape: bf16[128,128], index: 3, kind: input, shape index: {}]
  %s4 = inlined_call_operand.vmem [shape: bf16[384,128], index: 4, kind: output, shape index: {}]
  %s5 = sld [smem:[#allocation0]]
  $region57: #{encoder_forward.4} parent=0
    _
  %s7 = ssub.s32 1, %s5
  %s8 = scalar_select 0, %s7, %s5
  loop: start=0, step=1, limit=5
  $region2: #{encoder_forward.4} parent=0 // loop_pre_header
    _
  $region3: #{encoder_forward.4} parent=0 // loop_header
    %s10 = sphi 0, %s14
    %p11 = scmp.ge.s32.totalorder %s10, 5
    %s17 = sphi 0, %s29
    %s18 = sphi 0, %s25
    %s19 = sphi 0, %s17
    %s20 = sphi 0, %s18
    %s21 = sphi 0, %s19
    %s22 = sphi 0, %s20
    %s34 = sphi 0, %s36
    %s37 = sphi 0, %s34
    %s38 = sphi 0, %s37
    %s54 = sphi 0, %s38
    %s58 = sphi 0, %s58
    %s60 = sphi 0, %s58
    %s61 = sphi 0, %s60
    %s75 = sphi 0, %s61
    %s79 = sphi 0, %s79
    %s81 = sphi 0, %s79
    %s82 = sphi 0, %s81
    %s96 = sphi 0, %s82
    %s100 = sphi 0, %s100
    %s102 = sphi 0, %s100
    %s103 = sphi 0, %s102
    %s117 = sphi 0, %s103
    %s123 = sphi 0, %s125
    %s126 = sphi 0, %s123
    %s127 = sphi 0, %s126
    %s143 = sphi 0, %s127
  $region4: #{encoder_forward.4} parent=0 // loop_header_branch
    %13 = sbr.rel (%p11) target = $region8
  $region5: #{encoder_forward.4} parent=0 // loop_body
    %s15 = ssub.s32 %s10, 1
    %s16 = ssub.s32 %s10, 2
    %s23 = sadd.s32 1, %s18
    %p24 = scmp.ge.s32.totalorder %s23, 1
    %s25 = scalar_select %p24, 0, %s23
    %s26 = sadd.s32 1, %s17
    %s27 = scalar_select %p24, %s26, %s17
    %p28 = scmp.ge.s32.totalorder %s27, 3
    %s29 = scalar_select %p28, 0, %s27
    %s30 = ssub.s32 %s17, %s29
    %s31 = ssub.s32 %s18, %s25
    %s32 = sor.u32 %s30, %s31
    %p33 = scmp.eq.s32.totalorder %s32, 0
    %s35 = sadd.s32 %s34, 1
    %s36 = scalar_select %p33, %s34, %s35
    %p39 = pneg %p33
    %p40 = scmp.eq.s32.totalorder %s10, 2
    %p41 = por %p39, %p40
    %p42 = scmp.ne.s32.totalorder %s34, %s37
    %p43 = scmp.eq.s32.totalorder %s10, 0
    %p44 = por %p42, %p43
    %p45 = scmp.ne.s32.totalorder %s34, %s37
    %p46 = scmp.eq.s32.totalorder %s15, 2
    %p47 = por %p45, %p46
    %p48 = scmp.ne.s32.totalorder %s37, %s38
    %p49 = scmp.eq.s32.totalorder %s15, 0
    %p50 = por %p48, %p49
    %p51 = scmp.ne.s32.totalorder %s37, %s38
    %p52 = scmp.eq.s32.totalorder %s16, 2
    %p53 = por %p51, %p52
    %p55 = scmp.ne.s32.totalorder %s38, %s54
    %p56 = scmp.eq.s32.totalorder %s16, 0
    %p57 = por %p55, %p56
    %s59 = sadd.s32 %s58, 1
    %p62 = scmp.eq.s32.totalorder %s10, 2
    %p63 = scmp.ne.s32.totalorder %s58, %s60
    %p64 = scmp.eq.s32.totalorder %s10, 0
    %p65 = por %p63, %p64
    %p66 = scmp.ne.s32.totalorder %s58, %s60
    %p67 = scmp.eq.s32.totalorder %s15, 2
    %p68 = por %p66, %p67
    %p69 = scmp.ne.s32.totalorder %s60, %s61
    %p70 = scmp.eq.s32.totalorder %s15, 0
    %p71 = por %p69, %p70
    %p72 = scmp.ne.s32.totalorder %s60, %s61
    %p73 = scmp.eq.s32.totalorder %s16, 2
    %p74 = por %p72, %p73
    %p76 = scmp.ne.s32.totalorder %s61, %s75
    %p77 = scmp.eq.s32.totalorder %s16, 0
    %p78 = por %p76, %p77
    %s80 = sadd.s32 %s79, 1
    %p83 = scmp.eq.s32.totalorder %s10, 2
    %p84 = scmp.ne.s32.totalorder %s79, %s81
    %p85 = scmp.eq.s32.totalorder %s10, 0
    %p86 = por %p84, %p85
    %p87 = scmp.ne.s32.totalorder %s79, %s81
    %p88 = scmp.eq.s32.totalorder %s15, 2
    %p89 = por %p87, %p88
    %p90 = scmp.ne.s32.totalorder %s81, %s82
    %p91 = scmp.eq.s32.totalorder %s15, 0
    %p92 = por %p90, %p91
    %p93 = scmp.ne.s32.totalorder %s81, %s82
    %p94 = scmp.eq.s32.totalorder %s16, 2
    %p95 = por %p93, %p94
    %p97 = scmp.ne.s32.totalorder %s82, %s96
    %p98 = scmp.eq.s32.totalorder %s16, 0
    %p99 = por %p97, %p98
    %s101 = sadd.s32 %s100, 1
    %p104 = scmp.eq.s32.totalorder %s10, 2
    %p105 = scmp.ne.s32.totalorder %s100, %s102
    %p106 = scmp.eq.s32.totalorder %s10, 0
    %p107 = por %p105, %p106
    %p108 = scmp.ne.s32.totalorder %s100, %s102
    %p109 = scmp.eq.s32.totalorder %s15, 2
    %p110 = por %p108, %p109
    %p111 = scmp.ne.s32.totalorder %s102, %s103
    %p112 = scmp.eq.s32.totalorder %s15, 0
    %p113 = por %p111, %p112
    %p114 = scmp.ne.s32.totalorder %s102, %s103
    %p115 = scmp.eq.s32.totalorder %s16, 2
    %p116 = por %p114, %p115
    %p118 = scmp.ne.s32.totalorder %s103, %s117
    %p119 = scmp.eq.s32.totalorder %s16, 0
    %p120 = por %p118, %p119
    %s121 = ssub.s32 %s17, %s29
    %p122 = scmp.eq.s32.totalorder %s121, 0
    %s124 = sadd.s32 %s123, 1
    %s125 = scalar_select %p122, %s123, %s124
    %p128 = pneg %p122
    %p129 = scmp.eq.s32.totalorder %s10, 2
    %p130 = por %p128, %p129
    %p131 = scmp.ne.s32.totalorder %s123, %s126
    %p132 = scmp.eq.s32.totalorder %s10, 0
    %p133 = por %p131, %p132
    %p134 = scmp.ne.s32.totalorder %s123, %s126
    %p135 = scmp.eq.s32.totalorder %s15, 2
    %p136 = por %p134, %p135
    %p137 = scmp.ne.s32.totalorder %s126, %s127
    %p138 = scmp.eq.s32.totalorder %s15, 0
    %p139 = por %p137, %p138
    %p140 = scmp.ne.s32.totalorder %s126, %s127
    %p141 = scmp.eq.s32.totalorder %s16, 2
    %p142 = por %p140, %p141
    %p144 = scmp.ne.s32.totalorder %s127, %s143
    %p145 = scmp.eq.s32.totalorder %s16, 0
    %p146 = por %p144, %p145
    %p147 = scmp.le.s32.totalorder 1, %s10
    %p148 = scmp.lt.s32.totalorder %s10, 4
    %p149 = pnand %p147, %p148
    %p150 = pneg %p149
    // Predicated region
    $region9: #{encoder_forward.4} parent=5 // pred_check
      _
    $region10: #{encoder_forward.4} parent=5 // pred_check_branch
      %152 = sbr.rel (%p149) target = $region12
    $region11: #{encoder_forward.4} parent=5 // pred_region
      %s153 = ssub.s32 %s10, 1
      // Predicated region
      $region13: #{encoder_forward.4} parent=11 // pred_check
        %p154 = pneg %p71
      $region14: #{encoder_forward.4} parent=11 // pred_check_branch
        %156 = sbr.rel (%p154) target = $region16
      $region15: #{encoder_forward.4} parent=11 // pred_region
        _
      $region16: #{encoder_forward.4} parent=11 // pred_fallthru
        _
      // Predicated region
      $region17: #{encoder_forward.4} parent=11 // pred_check
        %p157 = pneg %p92
      $region18: #{encoder_forward.4} parent=11 // pred_check_branch
        %159 = sbr.rel (%p157) target = $region20
      $region19: #{encoder_forward.4} parent=11 // pred_region
        _
      $region20: #{encoder_forward.4} parent=11 // pred_fallthru
        _
      // Predicated region
      $region21: #{encoder_forward.4} parent=11 // pred_check
        %p160 = pneg %p113
      $region22: #{encoder_forward.4} parent=11 // pred_check_branch
        %162 = sbr.rel (%p160) target = $region24
      $region23: #{encoder_forward.4} parent=11 // pred_region
        _
      $region24: #{encoder_forward.4} parent=11 // pred_fallthru
        _
    $region12: #{encoder_forward.4} parent=5 // pred_fallthru
      _
    %p163 = scmp.lt.s32.totalorder %s10, 3
    // Predicated region
    $region25: #{encoder_forward.4} parent=5 // pred_check
      %p164 = pneg %p163
    $region26: #{encoder_forward.4} parent=5 // pred_check_branch
      %166 = sbr.rel (%p164) target = $region28
    $region27: #{encoder_forward.4} parent=5 // pred_region
      // Predicated region
      $region29: #{encoder_forward.4} parent=27 // pred_check
        %p167 = pneg %p44
      $region30: #{encoder_forward.4} parent=27 // pred_check_branch
        %169 = sbr.rel (%p167) target = $region32
      $region31: #{encoder_forward.4} parent=27 // pred_region
        %s170 = smul.u32 16, %s17
        %s171 = smul.u32 3, %s18
        %p172 = scmp.lt.s32.totalorder %s170, 47
        %s173 = scalar_select %p172, %s170, 47
        %p174 = scmp.lt.s32.totalorder %s171, 2
        %s175 = scalar_select %p174, %s171, 2
        %s176 = smul.addr %s173, 3
        %s177 = sadd.s32 %s175, %s176
        %s178 = smul.addr %s177, 4
        %s179 = scalar_lea.vmem %s0, %s178
        %s180 = smul.u32 16, %s17
        %s181 = smul.u32 3, %s18
      $region32: #{encoder_forward.4} parent=27 // pred_fallthru
        _
    $region28: #{encoder_forward.4} parent=5 // pred_fallthru
      _
    %p182 = scmp.le.s32.totalorder 1, %s10
    %p183 = scmp.lt.s32.totalorder %s10, 4
    %p184 = pnand %p182, %p183
    %p185 = pneg %p184
    // Predicated region
    $region33: #{encoder_forward.4} parent=5 // pred_check
      _
    $region34: #{encoder_forward.4} parent=5 // pred_check_branch
      %187 = sbr.rel (%p184) target = $region36
    $region35: #{encoder_forward.4} parent=5 // pred_region
      %s188 = ssub.s32 %s10, 1
      %s189 = smul.u32 16, %s19
      %s190 = smul.u32 3, %s20
      %p191 = scmp.lt.s32.totalorder %s189, 47
      %s192 = scalar_select %p191, %s189, 47
      %p193 = scmp.lt.s32.totalorder %s190, 2
      %s194 = scalar_select %p193, %s190, 2
      %s195 = smul.addr %s192, 3
      %s196 = sadd.s32 %s194, %s195
      %s197 = smul.addr %s196, 4
      %s198 = scalar_lea.vmem %s0, %s197
      %p199 = pneg %p50
      %p200 = pneg %p47
      %p201 = pneg %p71
      %p202 = pneg %p68
      %p203 = pneg %p92
      %p204 = pneg %p89
      %p205 = pneg %p113
      %p206 = pneg %p110
      %p207 = pneg %p139
      %p208 = pneg %p136
      %s209 = smul.u32 16, %s19
      %p210 = scmp.lt.s32.totalorder %s209, 47
      %s211 = scalar_select %p210, %s209, 47
      %s212 = smul.addr %s211, 4
      %s213 = scalar_lea.vmem %s4, %s212
      %s214 = smul.u32 16, %s19
      %s215 = smul.u32 3, %s20
      %p216 = scmp.lt.s32.totalorder %s214, 47
      %s217 = scalar_select %p216, %s214, 47
      %p218 = scmp.lt.s32.totalorder %s215, 2
      %s219 = scalar_select %p218, %s215, 2
      %s220 = smul.addr %s217, 3
      %s221 = sadd.s32 %s219, %s220
      %s222 = smul.addr %s221, 4
      %s223 = scalar_lea.vmem %s0, %s222
      %s224 = smul.u32 16, %s19
      %s225 = smul.u32 3, %s20
      %s226 = smul.u32 16, %s19
      %p227 = scmp.lt.s32.totalorder %s226, 47
      %s228 = scalar_select %p227, %s226, 47
      %s229 = smul.addr %s228, 4
      %s230 = scalar_lea.vmem %s4, %s229
      %s231 = smul.u32 16, %s19
      %p232 = scmp.eq.s32.totalorder %s20, 0
      // Predicated region
      $region37: #{encoder_forward.4} parent=35 // pred_check
        %p233 = pneg %p232
      $region38: #{encoder_forward.4} parent=35 // pred_check_branch
        %235 = sbr.rel (%p233) target = $region40
      $region39: #{encoder_forward.4} parent=35 // pred_region
        %236 = vst [vmem:[#allocation2] sm:$0xff] 0.0
        %237 = vst [vmem:[#allocation2 + $0x8] sm:$0xff] 0.0
        %238 = vst [vmem:[#allocation2 + $0x10] sm:$0xff] 0.0
        %239 = vst [vmem:[#allocation2 + $0x18] sm:$0xff] 0.0
        %240 = vst [vmem:[#allocation2 + $0x20] sm:$0xff] 0.0
        %241 = vst [vmem:[#allocation2 + $0x28] sm:$0xff] 0.0
        %242 = vst [vmem:[#allocation2 + $0x30] sm:$0xff] 0.0
        %243 = vst [vmem:[#allocation2 + $0x38] sm:$0xff] 0.0
        %244 = vst [vmem:[#allocation2 + $0x40] sm:$0xff] 0.0
        %245 = vst [vmem:[#allocation2 + $0x48] sm:$0xff] 0.0
        %246 = vst [vmem:[#allocation2 + $0x50] sm:$0xff] 0.0
        %247 = vst [vmem:[#allocation2 + $0x58] sm:$0xff] 0.0
        %248 = vst [vmem:[#allocation2 + $0x60] sm:$0xff] 0.0
        %249 = vst [vmem:[#allocation2 + $0x68] sm:$0xff] 0.0
        %250 = vst [vmem:[#allocation2 + $0x70] sm:$0xff] 0.0
        %251 = vst [vmem:[#allocation2 + $0x78] sm:$0xff] 0.0
      $region40: #{encoder_forward.4} parent=35 // pred_fallthru
        _
      %v252 = vld [vmem:[#allocation2] sm:$0xff]
      %v253 = vld [vmem:[#allocation2 + $0x8] sm:$0xff]
      %v254 = vld [vmem:[#allocation2 + $0x10] sm:$0xff]
      %v255 = vld [vmem:[#allocation2 + $0x18] sm:$0xff]
      %v256 = vld [vmem:[#allocation2 + $0x20] sm:$0xff]
      %v257 = vld [vmem:[#allocation2 + $0x28] sm:$0xff]
      %v258 = vld [vmem:[#allocation2 + $0x30] sm:$0xff]
      %v259 = vld [vmem:[#allocation2 + $0x38] sm:$0xff]
      %v260 = vld [vmem:[#allocation2 + $0x40] sm:$0xff]
      %v261 = vld [vmem:[#allocation2 + $0x48] sm:$0xff]
      %v262 = vld [vmem:[#allocation2 + $0x50] sm:$0xff]
      %v263 = vld [vmem:[#allocation2 + $0x58] sm:$0xff]
      %v264 = vld [vmem:[#allocation2 + $0x60] sm:$0xff]
      %v265 = vld [vmem:[#allocation2 + $0x68] sm:$0xff]
      %v266 = vld [vmem:[#allocation2 + $0x70] sm:$0xff]
      %v267 = vld [vmem:[#allocation2 + $0x78] sm:$0xff]
      %v268 = vld [vmem:[%s223] sm:$0xff]
      %v269 = vld [vmem:[%s223 + $0x8] sm:$0xf]
      %v270 = vld [vmem:[%s223 + $0xc] sm:$0xff]
      %v271 = vld [vmem:[%s223 + $0x14] sm:$0xf]
      %v272 = vld [vmem:[%s223 + $0x18] sm:$0xff]
      %v273 = vld [vmem:[%s223 + $0x20] sm:$0xf]
      %v274 = vld [vmem:[%s223 + $0x24] sm:$0xff]
      %v275 = vld [vmem:[%s223 + $0x2c] sm:$0xf]
      %v276 = vld [vmem:[%s223 + $0x30] sm:$0xff]
      %v277 = vld [vmem:[%s223 + $0x38] sm:$0xf]
      %v278 = vld [vmem:[%s223 + $0x3c] sm:$0xff]
      %v279 = vld [vmem:[%s223 + $0x44] sm:$0xf]
      %v280 = vld [vmem:[%s223 + $0x48] sm:$0xff]
      %v281 = vld [vmem:[%s223 + $0x50] sm:$0xf]
      %v282 = vld [vmem:[%s223 + $0x54] sm:$0xff]
      %v283 = vld [vmem:[%s223 + $0x5c] sm:$0xf]
      %v284 = vld [vmem:[%s223 + $0x60] sm:$0xff]
      %v285 = vld [vmem:[%s223 + $0x68] sm:$0xf]
      %v286 = vld [vmem:[%s223 + $0x6c] sm:$0xff]
      %v287 = vld [vmem:[%s223 + $0x74] sm:$0xf]
      %v288 = vld [vmem:[%s223 + $0x78] sm:$0xff]
      %v289 = vld [vmem:[%s223 + $0x80] sm:$0xf]
      %v290 = vld [vmem:[%s223 + $0x84] sm:$0xff]
      %v291 = vld [vmem:[%s223 + $0x8c] sm:$0xf]
      %v292 = vld [vmem:[%s223 + $0x90] sm:$0xff]
      %v293 = vld [vmem:[%s223 + $0x98] sm:$0xf]
      %v294 = vld [vmem:[%s223 + $0x9c] sm:$0xff]
      %v295 = vld [vmem:[%s223 + $0xa4] sm:$0xf]
      %v296 = vld [vmem:[%s223 + $0xa8] sm:$0xff]
      %v297 = vld [vmem:[%s223 + $0xb0] sm:$0xf]
      %v298 = vld [vmem:[%s223 + $0xb4] sm:$0xff]
      %v299 = vld [vmem:[%s223 + $0xbc] sm:$0xf]
      %v300 = vld [vmem:[%s1] sm:$0xf]
      %v301 = vld [vmem:[%s1 + $0x4] sm:$0xf]
      %v302 = vld [vmem:[%s1 + $0x8] sm:$0xf]
      %v303 = vld [vmem:[%s1 + $0xc] sm:$0xf]
      %v304 = vld [vmem:[%s1 + $0x10] sm:$0xf]
      %v305 = vld [vmem:[%s1 + $0x14] sm:$0xf]
      %v306 = vld [vmem:[%s1 + $0x18] sm:$0xf]
      %v307 = vld [vmem:[%s1 + $0x1c] sm:$0xf]
      %v308 = vld [vmem:[%s1 + $0x20] sm:$0xf]
      %v309 = vld [vmem:[%s1 + $0x24] sm:$0xf]
      %v310 = vld [vmem:[%s1 + $0x28] sm:$0xf]
      %v311 = vld [vmem:[%s1 + $0x2c] sm:$0xf]
      %v312 = vld [vmem:[%s1 + $0x30] sm:$0xf]
      %v313 = vld [vmem:[%s1 + $0x34] sm:$0xf]
      %v314 = vld [vmem:[%s1 + $0x38] sm:$0xf]
      %v315 = vld [vmem:[%s1 + $0x3c] sm:$0xf]
      %v316 = vld [vmem:[%s1 + $0x40] sm:$0xf]
      %v317 = vld [vmem:[%s1 + $0x44] sm:$0xf]
      %v318 = vld [vmem:[%s1 + $0x48] sm:$0xf]
      %v319 = vld [vmem:[%s1 + $0x4c] sm:$0xf]
      %v320 = vld [vmem:[%s1 + $0x50] sm:$0xf]
      %v321 = vld [vmem:[%s1 + $0x54] sm:$0xf]
      %v322 = vld [vmem:[%s1 + $0x58] sm:$0xf]
      %v323 = vld [vmem:[%s1 + $0x5c] sm:$0xf]
      %v324 = vld [vmem:[%s1 + $0x60] sm:$0xf]
      %v325 = vld [vmem:[%s1 + $0x64] sm:$0xf]
      %v326 = vld [vmem:[%s1 + $0x68] sm:$0xf]
      %v327 = vld [vmem:[%s1 + $0x6c] sm:$0xf]
      %v328 = vld [vmem:[%s1 + $0x70] sm:$0xf]
      %v329 = vld [vmem:[%s1 + $0x74] sm:$0xf]
      %v330 = vld [vmem:[%s1 + $0x78] sm:$0xf]
      %v331 = vld [vmem:[%s1 + $0x7c] sm:$0xf]
      %v332 = vld [vmem:[%s1 + $0x80] sm:$0xf]
      %v333 = vld [vmem:[%s1 + $0x84] sm:$0xf]
      %v334 = vld [vmem:[%s1 + $0x88] sm:$0xf]
      %v335 = vld [vmem:[%s1 + $0x8c] sm:$0xf]
      %v336 = vld [vmem:[%s1 + $0x90] sm:$0xf]
      %v337 = vld [vmem:[%s1 + $0x94] sm:$0xf]
      %v338 = vld [vmem:[%s1 + $0x98] sm:$0xf]
      %v339 = vld [vmem:[%s1 + $0x9c] sm:$0xf]
      %v340 = vld [vmem:[%s1 + $0xa0] sm:$0xf]
      %v341 = vld [vmem:[%s1 + $0xa4] sm:$0xf]
      %v342 = vld [vmem:[%s1 + $0xa8] sm:$0xf]
      %v343 = vld [vmem:[%s1 + $0xac] sm:$0xf]
      %v344 = vld [vmem:[%s1 + $0xb0] sm:$0xf]
      %v345 = vld [vmem:[%s1 + $0xb4] sm:$0xf]
      %v346 = vld [vmem:[%s1 + $0xb8] sm:$0xf]
      %v347 = vld [vmem:[%s1 + $0xbc] sm:$0xf]
      %v380 = vunpack.c.l.b16 %v268
      %v381 = vunpack.c.h.b16 %v268
      %v382 = vunpack.c.l.b16 %v269
      %v383 = vunpack.c.l.b16 %v270
      %v384 = vunpack.c.h.b16 %v270
      %v385 = vunpack.c.l.b16 %v271
      %v386 = vunpack.c.l.b16 %v272
      %v387 = vunpack.c.h.b16 %v272
      %v388 = vunpack.c.l.b16 %v273
      %v389 = vunpack.c.l.b16 %v274
      %v390 = vunpack.c.h.b16 %v274
      %v391 = vunpack.c.l.b16 %v275
      %v392 = vunpack.c.l.b16 %v276
      %v393 = vunpack.c.h.b16 %v276
      %v394 = vunpack.c.l.b16 %v277
      %v395 = vunpack.c.l.b16 %v278
      %v396 = vunpack.c.h.b16 %v278
      %v397 = vunpack.c.l.b16 %v279
      %v398 = vunpack.c.l.b16 %v280
      %v399 = vunpack.c.h.b16 %v280
      %v400 = vunpack.c.l.b16 %v281
      %v401 = vunpack.c.l.b16 %v282
      %v402 = vunpack.c.h.b16 %v282
      %v403 = vunpack.c.l.b16 %v283
      %v404 = vunpack.c.l.b16 %v284
      %v405 = vunpack.c.h.b16 %v284
      %v406 = vunpack.c.l.b16 %v285
      %v407 = vunpack.c.l.b16 %v286
      %v408 = vunpack.c.h.b16 %v286
      %v409 = vunpack.c.l.b16 %v287
      %v410 = vunpack.c.l.b16 %v288
      %v411 = vunpack.c.h.b16 %v288
      %v412 = vunpack.c.l.b16 %v289
      %v413 = vunpack.c.l.b16 %v290
      %v414 = vunpack.c.h.b16 %v290
      %v415 = vunpack.c.l.b16 %v291
      %v416 = vunpack.c.l.b16 %v292
      %v417 = vunpack.c.h.b16 %v292
      %v418 = vunpack.c.l.b16 %v293
      %v419 = vunpack.c.l.b16 %v294
      %v420 = vunpack.c.h.b16 %v294
      %v421 = vunpack.c.l.b16 %v295
      %v422 = vunpack.c.l.b16 %v296
      %v423 = vunpack.c.h.b16 %v296
      %v424 = vunpack.c.l.b16 %v297
      %v425 = vunpack.c.l.b16 %v298
      %v426 = vunpack.c.h.b16 %v298
      %v427 = vunpack.c.l.b16 %v299
      %v428 = vpack.c.b16 %v383, %v380
      %v429 = vpack.c.b16 %v384, %v381
      %v430 = vpack.c.b16 %v385, %v382
      %v431 = vpack.c.b16 %v389, %v386
      %v432 = vpack.c.b16 %v390, %v387
      %v433 = vpack.c.b16 %v391, %v388
      %v434 = vpack.c.b16 %v395, %v392
      %v435 = vpack.c.b16 %v396, %v393
      %v436 = vpack.c.b16 %v397, %v394
      %v437 = vpack.c.b16 %v401, %v398
      %v438 = vpack.c.b16 %v402, %v399
      %v439 = vpack.c.b16 %v403, %v400
      %v440 = vpack.c.b16 %v407, %v404
      %v441 = vpack.c.b16 %v408, %v405
      %v442 = vpack.c.b16 %v409, %v406
      %v443 = vpack.c.b16 %v413, %v410
      %v444 = vpack.c.b16 %v414, %v411
      %v445 = vpack.c.b16 %v415, %v412
      %v446 = vpack.c.b16 %v419, %v416
      %v447 = vpack.c.b16 %v420, %v417
      %v448 = vpack.c.b16 %v421, %v418
      %v449 = vpack.c.b16 %v425, %v422
      %v450 = vpack.c.b16 %v426, %v423
      %v451 = vpack.c.b16 %v427, %v424
      %v524 = vunpack.c.l.b16 %v300
      %v525 = vunpack.c.l.b16 %v301
      %v526 = vunpack.c.l.b16 %v302
      %v527 = vunpack.c.l.b16 %v303
      %v528 = vunpack.c.l.b16 %v304
      %v529 = vunpack.c.l.b16 %v305
      %v530 = vunpack.c.l.b16 %v306
      %v531 = vunpack.c.l.b16 %v307
      %v532 = vunpack.c.l.b16 %v308
      %v533 = vunpack.c.l.b16 %v309
      %v534 = vunpack.c.l.b16 %v310
      %v535 = vunpack.c.l.b16 %v311
      %v536 = vunpack.c.l.b16 %v312
      %v537 = vunpack.c.l.b16 %v313
      %v538 = vunpack.c.l.b16 %v314
      %v539 = vunpack.c.l.b16 %v315
      %v540 = vunpack.c.l.b16 %v316
      %v541 = vunpack.c.l.b16 %v317
      %v542 = vunpack.c.l.b16 %v318
      %v543 = vunpack.c.l.b16 %v319
      %v544 = vunpack.c.l.b16 %v320
      %v545 = vunpack.c.l.b16 %v321
      %v546 = vunpack.c.l.b16 %v322
      %v547 = vunpack.c.l.b16 %v323
      %v548 = vunpack.c.l.b16 %v324
      %v549 = vunpack.c.l.b16 %v325
      %v550 = vunpack.c.l.b16 %v326
      %v551 = vunpack.c.l.b16 %v327
      %v552 = vunpack.c.l.b16 %v328
      %v553 = vunpack.c.l.b16 %v329
      %v554 = vunpack.c.l.b16 %v330
      %v555 = vunpack.c.l.b16 %v331
      %v556 = vunpack.c.l.b16 %v332
      %v557 = vunpack.c.l.b16 %v333
      %v558 = vunpack.c.l.b16 %v334
      %v559 = vunpack.c.l.b16 %v335
      %v560 = vunpack.c.l.b16 %v336
      %v561 = vunpack.c.l.b16 %v337
      %v562 = vunpack.c.l.b16 %v338
      %v563 = vunpack.c.l.b16 %v339
      %v564 = vunpack.c.l.b16 %v340
      %v565 = vunpack.c.l.b16 %v341
      %v566 = vunpack.c.l.b16 %v342
      %v567 = vunpack.c.l.b16 %v343
      %v568 = vunpack.c.l.b16 %v344
      %v569 = vunpack.c.l.b16 %v345
      %v570 = vunpack.c.l.b16 %v346
      %v571 = vunpack.c.l.b16 %v347
      %v572 = vpack.c.b16 %v525, %v524
      %v573 = vpack.c.b16 %v527, %v526
      %v574 = vpack.c.b16 %v529, %v528
      %v575 = vpack.c.b16 %v531, %v530
      %v576 = vpack.c.b16 %v533, %v532
      %v577 = vpack.c.b16 %v535, %v534
      %v578 = vpack.c.b16 %v537, %v536
      %v579 = vpack.c.b16 %v539, %v538
      %v580 = vpack.c.b16 %v541, %v540
      %v581 = vpack.c.b16 %v543, %v542
      %v582 = vpack.c.b16 %v545, %v544
      %v583 = vpack.c.b16 %v547, %v546
      %v584 = vpack.c.b16 %v549, %v548
      %v585 = vpack.c.b16 %v551, %v550
      %v586 = vpack.c.b16 %v553, %v552
      %v587 = vpack.c.b16 %v555, %v554
      %v588 = vpack.c.b16 %v557, %v556
      %v589 = vpack.c.b16 %v559, %v558
      %v590 = vpack.c.b16 %v561, %v560
      %v591 = vpack.c.b16 %v563, %v562
      %v592 = vpack.c.b16 %v565, %v564
      %v593 = vpack.c.b16 %v567, %v566
      %v594 = vpack.c.b16 %v569, %v568
      %v595 = vpack.c.b16 %v571, %v570
      %620 = vmatpush.bf16.msra.mxu0 %v579
      %621 = vmatpush.bf16.msra.mxu0 %v578
      %622 = vmatpush.bf16.msra.mxu0 %v577
      %623 = vmatpush.bf16.msra.mxu0 %v576
      %624 = vmatpush.bf16.msra.mxu0 %v575
      %625 = vmatpush.bf16.msra.mxu0 %v574
      %626 = vmatpush.bf16.msra.mxu0 %v573
      %627 = vmatpush.bf16.msra.mxu0 %v572
      %628 = vmatmul.bf16.gmra.mxu0 %v428
      %v629 = vpop.f32.mrf.mxu0
      %v630 = vadd.f32 0.0, %v629
      %v631 = vpop.f32.mrf.mxu0
      %v632 = vadd.f32 0.0, %v631
      %633 = vmatmul.bf16.gmra.mxu0 %v431
      %v634 = vpop.f32.mrf.mxu0
      %v635 = vadd.f32 0.0, %v634
      %v636 = vpop.f32.mrf.mxu0
      %v637 = vadd.f32 0.0, %v636
      %638 = vmatmul.bf16.gmra.mxu0 %v434
      %v639 = vpop.f32.mrf.mxu0
      %v640 = vadd.f32 0.0, %v639
      %v641 = vpop.f32.mrf.mxu0
      %v642 = vadd.f32 0.0, %v641
      %643 = vmatmul.bf16.gmra.mxu0 %v437
      %v644 = vpop.f32.mrf.mxu0
      %v645 = vadd.f32 0.0, %v644
      %v646 = vpop.f32.mrf.mxu0
      %v647 = vadd.f32 0.0, %v646
      %648 = vmatmul.bf16.gmra.mxu0 %v440
      %v649 = vpop.f32.mrf.mxu0
      %v650 = vadd.f32 0.0, %v649
      %v651 = vpop.f32.mrf.mxu0
      %v652 = vadd.f32 0.0, %v651
      %653 = vmatmul.bf16.gmra.mxu0 %v443
      %v654 = vpop.f32.mrf.mxu0
      %v655 = vadd.f32 0.0, %v654
      %v656 = vpop.f32.mrf.mxu0
      %v657 = vadd.f32 0.0, %v656
      %658 = vmatmul.bf16.gmra.mxu0 %v446
      %v659 = vpop.f32.mrf.mxu0
      %v660 = vadd.f32 0.0, %v659
      %v661 = vpop.f32.mrf.mxu0
      %v662 = vadd.f32 0.0, %v661
      %663 = vmatmul.bf16.gmra.mxu0 %v449
      %v664 = vpop.f32.mrf.mxu0
      %v665 = vadd.f32 0.0, %v664
      %v666 = vpop.f32.mrf.mxu0
      %v667 = vadd.f32 0.0, %v666
      %668 = vdwg.mxu0
      %669 = vmatpush.bf16.msra.mxu0 %v587
      %670 = vmatpush.bf16.msra.mxu0 %v586
      %671 = vmatpush.bf16.msra.mxu0 %v585
      %672 = vmatpush.bf16.msra.mxu0 %v584
      %673 = vmatpush.bf16.msra.mxu0 %v583
      %674 = vmatpush.bf16.msra.mxu0 %v582
      %675 = vmatpush.bf16.msra.mxu0 %v581
      %676 = vmatpush.bf16.msra.mxu0 %v580
      %677 = vmatmul.bf16.gmra.mxu0 %v429
      %v678 = vpop.f32.mrf.mxu0
      %v679 = vadd.f32 %v630, %v678
      %v680 = vpop.f32.mrf.mxu0
      %v681 = vadd.f32 %v632, %v680
      %682 = vmatmul.bf16.gmra.mxu0 %v432
      %v683 = vpop.f32.mrf.mxu0
      %v684 = vadd.f32 %v635, %v683
      %v685 = vpop.f32.mrf.mxu0
      %v686 = vadd.f32 %v637, %v685
      %687 = vmatmul.bf16.gmra.mxu0 %v435
      %v688 = vpop.f32.mrf.mxu0
      %v689 = vadd.f32 %v640, %v688
      %v690 = vpop.f32.mrf.mxu0
      %v691 = vadd.f32 %v642, %v690
      %692 = vmatmul.bf16.gmra.mxu0 %v438
      %v693 = vpop.f32.mrf.mxu0
      %v694 = vadd.f32 %v645, %v693
      %v695 = vpop.f32.mrf.mxu0
      %v696 = vadd.f32 %v647, %v695
      %697 = vmatmul.bf16.gmra.mxu0 %v441
      %v698 = vpop.f32.mrf.mxu0
      %v699 = vadd.f32 %v650, %v698
      %v700 = vpop.f32.mrf.mxu0
      %v701 = vadd.f32 %v652, %v700
      %702 = vmatmul.bf16.gmra.mxu0 %v444
      %v703 = vpop.f32.mrf.mxu0
      %v704 = vadd.f32 %v655, %v703
      %v705 = vpop.f32.mrf.mxu0
      %v706 = vadd.f32 %v657, %v705
      %707 = vmatmul.bf16.gmra.mxu0 %v447
      %v708 = vpop.f32.mrf.mxu0
      %v709 = vadd.f32 %v660, %v708
      %v710 = vpop.f32.mrf.mxu0
      %v711 = vadd.f32 %v662, %v710
      %712 = vmatmul.bf16.gmra.mxu0 %v450
      %v713 = vpop.f32.mrf.mxu0
      %v714 = vadd.f32 %v665, %v713
      %v715 = vpop.f32.mrf.mxu0
      %v716 = vadd.f32 %v667, %v715
      %717 = vdwg.mxu0
      %718 = vmatpush.bf16.msra.mxu0 %v595
      %719 = vmatpush.bf16.msra.mxu0 %v594
      %720 = vmatpush.bf16.msra.mxu0 %v593
      %721 = vmatpush.bf16.msra.mxu0 %v592
      %722 = vmatpush.bf16.msra.mxu0 %v591
      %723 = vmatpush.bf16.msra.mxu0 %v590
      %724 = vmatpush.bf16.msra.mxu0 %v589
      %725 = vmatpush.bf16.msra.mxu0 %v588
      %726 = vmatmul.bf16.gmra.mxu0 %v430
      %v727 = vpop.f32.mrf.mxu0
      %v728 = vadd.f32 %v679, %v727
      %v729 = vpop.f32.mrf.mxu0
      %v730 = vadd.f32 %v681, %v729
      %731 = vmatmul.bf16.gmra.mxu0 %v433
      %v732 = vpop.f32.mrf.mxu0
      %v733 = vadd.f32 %v684, %v732
      %v734 = vpop.f32.mrf.mxu0
      %v735 = vadd.f32 %v686, %v734
      %736 = vmatmul.bf16.gmra.mxu0 %v436
      %v737 = vpop.f32.mrf.mxu0
      %v738 = vadd.f32 %v689, %v737
      %v739 = vpop.f32.mrf.mxu0
      %v740 = vadd.f32 %v691, %v739
      %741 = vmatmul.bf16.gmra.mxu0 %v439
      %v742 = vpop.f32.mrf.mxu0
      %v743 = vadd.f32 %v694, %v742
      %v744 = vpop.f32.mrf.mxu0
      %v745 = vadd.f32 %v696, %v744
      %746 = vmatmul.bf16.gmra.mxu0 %v442
      %v747 = vpop.f32.mrf.mxu0
      %v748 = vadd.f32 %v699, %v747
      %v749 = vpop.f32.mrf.mxu0
      %v750 = vadd.f32 %v701, %v749
      %751 = vmatmul.bf16.gmra.mxu0 %v445
      %v752 = vpop.f32.mrf.mxu0
      %v753 = vadd.f32 %v704, %v752
      %v754 = vpop.f32.mrf.mxu0
      %v755 = vadd.f32 %v706, %v754
      %756 = vmatmul.bf16.gmra.mxu0 %v448
      %v757 = vpop.f32.mrf.mxu0
      %v758 = vadd.f32 %v709, %v757
      %v759 = vpop.f32.mrf.mxu0
      %v760 = vadd.f32 %v711, %v759
      %761 = vmatmul.bf16.gmra.mxu0 %v451
      %v762 = vpop.f32.mrf.mxu0
      %v763 = vadd.f32 %v714, %v762
      %v764 = vpop.f32.mrf.mxu0
      %v765 = vadd.f32 %v716, %v764
      %766 = vdwg.mxu0
      %v767 = vadd.f32 %v252, %v728
      %v768 = vadd.f32 %v253, %v730
      %v769 = vadd.f32 %v254, %v733
      %v770 = vadd.f32 %v255, %v735
      %v771 = vadd.f32 %v256, %v738
      %v772 = vadd.f32 %v257, %v740
      %v773 = vadd.f32 %v258, %v743
      %v774 = vadd.f32 %v259, %v745
      %v775 = vadd.f32 %v260, %v748
      %v776 = vadd.f32 %v261, %v750
      %v777 = vadd.f32 %v262, %v753
      %v778 = vadd.f32 %v263, %v755
      %v779 = vadd.f32 %v264, %v758
      %v780 = vadd.f32 %v265, %v760
      %v781 = vadd.f32 %v266, %v763
      %v782 = vadd.f32 %v267, %v765
      %783 = vst [vmem:[#allocation2] sm:$0xff] %v767
      %784 = vst [vmem:[#allocation2 + $0x8] sm:$0xff] %v768
      %785 = vst [vmem:[#allocation2 + $0x10] sm:$0xff] %v769
      %786 = vst [vmem:[#allocation2 + $0x18] sm:$0xff] %v770
      %787 = vst [vmem:[#allocation2 + $0x20] sm:$0xff] %v771
      %788 = vst [vmem:[#allocation2 + $0x28] sm:$0xff] %v772
      %789 = vst [vmem:[#allocation2 + $0x30] sm:$0xff] %v773
      %790 = vst [vmem:[#allocation2 + $0x38] sm:$0xff] %v774
      %791 = vst [vmem:[#allocation2 + $0x40] sm:$0xff] %v775
      %792 = vst [vmem:[#allocation2 + $0x48] sm:$0xff] %v776
      %793 = vst [vmem:[#allocation2 + $0x50] sm:$0xff] %v777
      %794 = vst [vmem:[#allocation2 + $0x58] sm:$0xff] %v778
      %795 = vst [vmem:[#allocation2 + $0x60] sm:$0xff] %v779
      %796 = vst [vmem:[#allocation2 + $0x68] sm:$0xff] %v780
      %797 = vst [vmem:[#allocation2 + $0x70] sm:$0xff] %v781
      %798 = vst [vmem:[#allocation2 + $0x78] sm:$0xff] %v782
      // Predicated region
      $region41: #{encoder_forward.4} parent=35 // pred_check
        %p799 = pneg %p232
      $region42: #{encoder_forward.4} parent=35 // pred_check_branch
        %801 = sbr.rel (%p799) target = $region44
      $region43: #{encoder_forward.4} parent=35 // pred_region
        %v802 = vld [vmem:[#allocation2] sm:$0xff]
        %v803 = vld [vmem:[#allocation2 + $0x8] sm:$0xff]
        %v804 = vld [vmem:[#allocation2 + $0x10] sm:$0xff]
        %v805 = vld [vmem:[#allocation2 + $0x18] sm:$0xff]
        %v806 = vld [vmem:[#allocation2 + $0x20] sm:$0xff]
        %v807 = vld [vmem:[#allocation2 + $0x28] sm:$0xff]
        %v808 = vld [vmem:[#allocation2 + $0x30] sm:$0xff]
        %v809 = vld [vmem:[#allocation2 + $0x38] sm:$0xff]
        %v810 = vld [vmem:[#allocation2 + $0x40] sm:$0xff]
        %v811 = vld [vmem:[#allocation2 + $0x48] sm:$0xff]
        %v812 = vld [vmem:[#allocation2 + $0x50] sm:$0xff]
        %v813 = vld [vmem:[#allocation2 + $0x58] sm:$0xff]
        %v814 = vld [vmem:[#allocation2 + $0x60] sm:$0xff]
        %v815 = vld [vmem:[#allocation2 + $0x68] sm:$0xff]
        %v816 = vld [vmem:[#allocation2 + $0x70] sm:$0xff]
        %v817 = vld [vmem:[#allocation2 + $0x78] sm:$0xff]
        %v818 = vld [vmem:[%s2] sm:$0x1]
        %v820 = vperm.slane %v818, 0
        %v822 = vadd.f32 %v802, %v820
        %v823 = vadd.f32 %v803, %v820
        %v824 = vadd.f32 %v804, %v820
        %v825 = vadd.f32 %v805, %v820
        %v826 = vadd.f32 %v806, %v820
        %v827 = vadd.f32 %v807, %v820
        %v828 = vadd.f32 %v808, %v820
        %v829 = vadd.f32 %v809, %v820
        %v830 = vadd.f32 %v810, %v820
        %v831 = vadd.f32 %v811, %v820
        %v832 = vadd.f32 %v812, %v820
        %v833 = vadd.f32 %v813, %v820
        %v834 = vadd.f32 %v814, %v820
        %v835 = vadd.f32 %v815, %v820
        %v836 = vadd.f32 %v816, %v820
        %v837 = vadd.f32 %v817, %v820
        %v838 = vmax.f32 %v822, 0.0
        %v839 = vmax.f32 %v823, 0.0
        %v840 = vmax.f32 %v824, 0.0
        %v841 = vmax.f32 %v825, 0.0
        %v842 = vmax.f32 %v826, 0.0
        %v843 = vmax.f32 %v827, 0.0
        %v844 = vmax.f32 %v828, 0.0
        %v845 = vmax.f32 %v829, 0.0
        %v846 = vmax.f32 %v830, 0.0
        %v847 = vmax.f32 %v831, 0.0
        %v848 = vmax.f32 %v832, 0.0
        %v849 = vmax.f32 %v833, 0.0
        %v850 = vmax.f32 %v834, 0.0
        %v851 = vmax.f32 %v835, 0.0
        %v852 = vmax.f32 %v836, 0.0
        %v853 = vmax.f32 %v837, 0.0
        %v854 = vpack.c.bf16 %v839, %v838
        %v855 = vpack.c.bf16 %v841, %v840
        %v856 = vpack.c.bf16 %v843, %v842
        %v857 = vpack.c.bf16 %v845, %v844
        %v858 = vpack.c.bf16 %v847, %v846
        %v859 = vpack.c.bf16 %v849, %v848
        %v860 = vpack.c.bf16 %v851, %v850
        %v861 = vpack.c.bf16 %v853, %v852
        %v862 = vld [vmem:[%s3] sm:$0xf]
        %v863 = vld [vmem:[%s3 + $0x4] sm:$0xf]
        %v864 = vld [vmem:[%s3 + $0x8] sm:$0xf]
        %v865 = vld [vmem:[%s3 + $0xc] sm:$0xf]
        %v866 = vld [vmem:[%s3 + $0x10] sm:$0xf]
        %v867 = vld [vmem:[%s3 + $0x14] sm:$0xf]
        %v868 = vld [vmem:[%s3 + $0x18] sm:$0xf]
        %v869 = vld [vmem:[%s3 + $0x1c] sm:$0xf]
        %v870 = vld [vmem:[%s3 + $0x20] sm:$0xf]
        %v871 = vld [vmem:[%s3 + $0x24] sm:$0xf]
        %v872 = vld [vmem:[%s3 + $0x28] sm:$0xf]
        %v873 = vld [vmem:[%s3 + $0x2c] sm:$0xf]
        %v874 = vld [vmem:[%s3 + $0x30] sm:$0xf]
        %v875 = vld [vmem:[%s3 + $0x34] sm:$0xf]
        %v876 = vld [vmem:[%s3 + $0x38] sm:$0xf]
        %v877 = vld [vmem:[%s3 + $0x3c] sm:$0xf]
        %v894 = vunpack.c.l.b16 %v862
        %v895 = vunpack.c.l.b16 %v863
        %v896 = vunpack.c.l.b16 %v864
        %v897 = vunpack.c.l.b16 %v865
        %v898 = vunpack.c.l.b16 %v866
        %v899 = vunpack.c.l.b16 %v867
        %v900 = vunpack.c.l.b16 %v868
        %v901 = vunpack.c.l.b16 %v869
        %v902 = vunpack.c.l.b16 %v870
        %v903 = vunpack.c.l.b16 %v871
        %v904 = vunpack.c.l.b16 %v872
        %v905 = vunpack.c.l.b16 %v873
        %v906 = vunpack.c.l.b16 %v874
        %v907 = vunpack.c.l.b16 %v875
        %v908 = vunpack.c.l.b16 %v876
        %v909 = vunpack.c.l.b16 %v877
        %v910 = vpack.c.b16 %v895, %v894
        %v911 = vpack.c.b16 %v897, %v896
        %v912 = vpack.c.b16 %v899, %v898
        %v913 = vpack.c.b16 %v901, %v900
        %v914 = vpack.c.b16 %v903, %v902
        %v915 = vpack.c.b16 %v905, %v904
        %v916 = vpack.c.b16 %v907, %v906
        %v917 = vpack.c.b16 %v909, %v908
        %926 = vmatpush.bf16.msra.mxu0 %v917
        %927 = vmatpush.bf16.msra.mxu0 %v916
        %928 = vmatpush.bf16.msra.mxu0 %v915
        %929 = vmatpush.bf16.msra.mxu0 %v914
        %930 = vmatpush.bf16.msra.mxu0 %v913
        %931 = vmatpush.bf16.msra.mxu0 %v912
        %932 = vmatpush.bf16.msra.mxu0 %v911
        %933 = vmatpush.bf16.msra.mxu0 %v910
        %934 = vmatmul.bf16.gmra.mxu0 %v854
        %v935 = vpop.f32.mrf.mxu0
        %v936 = vadd.f32 0.0, %v935
        %v937 = vpop.f32.mrf.mxu0
        %v938 = vadd.f32 0.0, %v937
        %939 = vmatmul.bf16.gmra.mxu0 %v855
        %v940 = vpop.f32.mrf.mxu0
        %v941 = vadd.f32 0.0, %v940
        %v942 = vpop.f32.mrf.mxu0
        %v943 = vadd.f32 0.0, %v942
        %944 = vmatmul.bf16.gmra.mxu0 %v856
        %v945 = vpop.f32.mrf.mxu0
        %v946 = vadd.f32 0.0, %v945
        %v947 = vpop.f32.mrf.mxu0
        %v948 = vadd.f32 0.0, %v947
        %949 = vmatmul.bf16.gmra.mxu0 %v857
        %v950 = vpop.f32.mrf.mxu0
        %v951 = vadd.f32 0.0, %v950
        %v952 = vpop.f32.mrf.mxu0
        %v953 = vadd.f32 0.0, %v952
        %954 = vmatmul.bf16.gmra.mxu0 %v858
        %v955 = vpop.f32.mrf.mxu0
        %v956 = vadd.f32 0.0, %v955
        %v957 = vpop.f32.mrf.mxu0
        %v958 = vadd.f32 0.0, %v957
        %959 = vmatmul.bf16.gmra.mxu0 %v859
        %v960 = vpop.f32.mrf.mxu0
        %v961 = vadd.f32 0.0, %v960
        %v962 = vpop.f32.mrf.mxu0
        %v963 = vadd.f32 0.0, %v962
        %964 = vmatmul.bf16.gmra.mxu0 %v860
        %v965 = vpop.f32.mrf.mxu0
        %v966 = vadd.f32 0.0, %v965
        %v967 = vpop.f32.mrf.mxu0
        %v968 = vadd.f32 0.0, %v967
        %969 = vmatmul.bf16.gmra.mxu0 %v861
        %v970 = vpop.f32.mrf.mxu0
        %v971 = vadd.f32 0.0, %v970
        %v972 = vpop.f32.mrf.mxu0
        %v973 = vadd.f32 0.0, %v972
        %974 = vdwg.mxu0
        %v975 = vpack.c.bf16 %v936, %v936
        %v976 = vpack.c.bf16 %v938, %v938
        %v977 = vpack.c.bf16 %v941, %v941
        %v978 = vpack.c.bf16 %v943, %v943
        %v979 = vpack.c.bf16 %v946, %v946
        %v980 = vpack.c.bf16 %v948, %v948
        %v981 = vpack.c.bf16 %v951, %v951
        %v982 = vpack.c.bf16 %v953, %v953
        %v983 = vpack.c.bf16 %v956, %v956
        %v984 = vpack.c.bf16 %v958, %v958
        %v985 = vpack.c.bf16 %v961, %v961
        %v986 = vpack.c.bf16 %v963, %v963
        %v987 = vpack.c.bf16 %v966, %v966
        %v988 = vpack.c.bf16 %v968, %v968
        %v989 = vpack.c.bf16 %v971, %v971
        %v990 = vpack.c.bf16 %v973, %v973
        %991 = vst [vmem:[%s230] sm:$0xf] %v975
        %992 = vst [vmem:[%s230 + $0x4] sm:$0xf] %v976
        %993 = vst [vmem:[%s230 + $0x8] sm:$0xf] %v977
        %994 = vst [vmem:[%s230 + $0xc] sm:$0xf] %v978
        %995 = vst [vmem:[%s230 + $0x10] sm:$0xf] %v979
        %996 = vst [vmem:[%s230 + $0x14] sm:$0xf] %v980
        %997 = vst [vmem:[%s230 + $0x18] sm:$0xf] %v981
        %998 = vst [vmem:[%s230 + $0x1c] sm:$0xf] %v982
        %999 = vst [vmem:[%s230 + $0x20] sm:$0xf] %v983
        %1000 = vst [vmem:[%s230 + $0x24] sm:$0xf] %v984
        %1001 = vst [vmem:[%s230 + $0x28] sm:$0xf] %v985
        %1002 = vst [vmem:[%s230 + $0x2c] sm:$0xf] %v986
        %1003 = vst [vmem:[%s230 + $0x30] sm:$0xf] %v987
        %1004 = vst [vmem:[%s230 + $0x34] sm:$0xf] %v988
        %1005 = vst [vmem:[%s230 + $0x38] sm:$0xf] %v989
        %1006 = vst [vmem:[%s230 + $0x3c] sm:$0xf] %v990
      $region44: #{encoder_forward.4} parent=35 // pred_fallthru
        _
      %s1007 = smul.u32 16, %s19
      %p1008 = scmp.lt.s32.totalorder %s1007, 47
      %s1009 = scalar_select %p1008, %s1007, 47
      %s1010 = smul.addr %s1009, 4
      %s1011 = scalar_lea.vmem %s4, %s1010
      // Predicated region
      $region45: #{encoder_forward.4} parent=35 // pred_check
        %p1012 = pneg %p136
      $region46: #{encoder_forward.4} parent=35 // pred_check_branch
        %1014 = sbr.rel (%p1012) target = $region48
      $region47: #{encoder_forward.4} parent=35 // pred_region
        %s1015 = smul.u32 16, %s19
      $region48: #{encoder_forward.4} parent=35 // pred_fallthru
        _
    $region36: #{encoder_forward.4} parent=5 // pred_fallthru
      _
    %p1016 = scmp.le.s32.totalorder 2, %s10
    // Predicated region
    $region49: #{encoder_forward.4} parent=5 // pred_check
      %p1017 = pneg %p1016
    $region50: #{encoder_forward.4} parent=5 // pred_check_branch
      %1019 = sbr.rel (%p1017) target = $region52
    $region51: #{encoder_forward.4} parent=5 // pred_region
      %s1020 = ssub.s32 %s10, 2
      // Predicated region
      $region53: #{encoder_forward.4} parent=51 // pred_check
        %p1021 = pneg %p142
      $region54: #{encoder_forward.4} parent=51 // pred_check_branch
        %1023 = sbr.rel (%p1021) target = $region56
      $region55: #{encoder_forward.4} parent=51 // pred_region
        %s1024 = smul.u32 16, %s21
        %p1025 = scmp.lt.s32.totalorder %s1024, 47
        %s1026 = scalar_select %p1025, %s1024, 47
        %s1027 = smul.addr %s1026, 4
        %s1028 = scalar_lea.vmem %s4, %s1027
      $region56: #{encoder_forward.4} parent=51 // pred_fallthru
        _
    $region52: #{encoder_forward.4} parent=5 // pred_fallthru
      _
  $region6: #{encoder_forward.4} parent=0 // loop_footer
    %s14 = sadd.s32 1, %s10
  $region7: #{encoder_forward.4} parent=0 // loop_footer_branch
    %9 = sbr.rel target = $region3
  $region8: #{encoder_forward.4} parent=0 // loop_exit
    _

// kernel: encoder_forward.5
$region0: #{encoder_forward.5}
  #allocation0 [shape = 'u32[]', space=smem, size = 0x4, offset = 0x4, fixed_abs, tag = 'smem constant byte address 0x4 - core index']
  #allocation1 [shape = 'u32[72,128]{1,0:T(1,128)}', space=vmem, size = 0x9000, scoped, tag = 'internal scratch']
  #allocation2 [shape = 'f32[128,128]{1,0:T(8,128)}', space=vmem, size = 0x10000, scoped, tag = 'scratch operand']
  %s0 = inlined_call_operand.vmem [shape: bf16[384,384], index: 0, kind: input, shape index: {}]
  %s1 = inlined_call_operand.vmem [shape: bf16[384,128], index: 1, kind: input, shape index: {}]
  %s2 = inlined_call_operand.vmem [shape: f32[1,128], index: 2, kind: input, shape index: {}]
  %s3 = inlined_call_operand.vmem [shape: f32[384,128], index: 3, kind: output, shape index: {}]
  %s4 = sld [smem:[#allocation0]]
  $region53: #{encoder_forward.5} parent=0
    _
  %s6 = ssub.s32 1, %s4
  %s7 = scalar_select 0, %s6, %s4
  loop: start=0, step=1, limit=5
  $region2: #{encoder_forward.5} parent=0 // loop_pre_header
    _
  $region3: #{encoder_forward.5} parent=0 // loop_header
    %s9 = sphi 0, %s13
    %p10 = scmp.ge.s32.totalorder %s9, 5
    %s16 = sphi 0, %s28
    %s17 = sphi 0, %s24
    %s18 = sphi 0, %s16
    %s19 = sphi 0, %s17
    %s20 = sphi 0, %s18
    %s21 = sphi 0, %s19
    %s33 = sphi 0, %s35
    %s36 = sphi 0, %s33
    %s37 = sphi 0, %s36
    %s53 = sphi 0, %s37
    %s57 = sphi 0, %s57
    %s59 = sphi 0, %s57
    %s60 = sphi 0, %s59
    %s74 = sphi 0, %s60
    %s78 = sphi 0, %s78
    %s80 = sphi 0, %s78
    %s81 = sphi 0, %s80
    %s95 = sphi 0, %s81
    %s101 = sphi 0, %s103
    %s104 = sphi 0, %s101
    %s105 = sphi 0, %s104
    %s121 = sphi 0, %s105
  $region4: #{encoder_forward.5} parent=0 // loop_header_branch
    %12 = sbr.rel (%p10) target = $region8
  $region5: #{encoder_forward.5} parent=0 // loop_body
    %s14 = ssub.s32 %s9, 1
    %s15 = ssub.s32 %s9, 2
    %s22 = sadd.s32 1, %s17
    %p23 = scmp.ge.s32.totalorder %s22, 1
    %s24 = scalar_select %p23, 0, %s22
    %s25 = sadd.s32 1, %s16
    %s26 = scalar_select %p23, %s25, %s16
    %p27 = scmp.ge.s32.totalorder %s26, 3
    %s28 = scalar_select %p27, 0, %s26
    %s29 = ssub.s32 %s16, %s28
    %s30 = ssub.s32 %s17, %s24
    %s31 = sor.u32 %s29, %s30
    %p32 = scmp.eq.s32.totalorder %s31, 0
    %s34 = sadd.s32 %s33, 1
    %s35 = scalar_select %p32, %s33, %s34
    %p38 = pneg %p32
    %p39 = scmp.eq.s32.totalorder %s9, 2
    %p40 = por %p38, %p39
    %p41 = scmp.ne.s32.totalorder %s33, %s36
    %p42 = scmp.eq.s32.totalorder %s9, 0
    %p43 = por %p41, %p42
    %p44 = scmp.ne.s32.totalorder %s33, %s36
    %p45 = scmp.eq.s32.totalorder %s14, 2
    %p46 = por %p44, %p45
    %p47 = scmp.ne.s32.totalorder %s36, %s37
    %p48 = scmp.eq.s32.totalorder %s14, 0
    %p49 = por %p47, %p48
    %p50 = scmp.ne.s32.totalorder %s36, %s37
    %p51 = scmp.eq.s32.totalorder %s15, 2
    %p52 = por %p50, %p51
    %p54 = scmp.ne.s32.totalorder %s37, %s53
    %p55 = scmp.eq.s32.totalorder %s15, 0
    %p56 = por %p54, %p55
    %s58 = sadd.s32 %s57, 1
    %p61 = scmp.eq.s32.totalorder %s9, 2
    %p62 = scmp.ne.s32.totalorder %s57, %s59
    %p63 = scmp.eq.s32.totalorder %s9, 0
    %p64 = por %p62, %p63
    %p65 = scmp.ne.s32.totalorder %s57, %s59
    %p66 = scmp.eq.s32.totalorder %s14, 2
    %p67 = por %p65, %p66
    %p68 = scmp.ne.s32.totalorder %s59, %s60
    %p69 = scmp.eq.s32.totalorder %s14, 0
    %p70 = por %p68, %p69
    %p71 = scmp.ne.s32.totalorder %s59, %s60
    %p72 = scmp.eq.s32.totalorder %s15, 2
    %p73 = por %p71, %p72
    %p75 = scmp.ne.s32.totalorder %s60, %s74
    %p76 = scmp.eq.s32.totalorder %s15, 0
    %p77 = por %p75, %p76
    %s79 = sadd.s32 %s78, 1
    %p82 = scmp.eq.s32.totalorder %s9, 2
    %p83 = scmp.ne.s32.totalorder %s78, %s80
    %p84 = scmp.eq.s32.totalorder %s9, 0
    %p85 = por %p83, %p84
    %p86 = scmp.ne.s32.totalorder %s78, %s80
    %p87 = scmp.eq.s32.totalorder %s14, 2
    %p88 = por %p86, %p87
    %p89 = scmp.ne.s32.totalorder %s80, %s81
    %p90 = scmp.eq.s32.totalorder %s14, 0
    %p91 = por %p89, %p90
    %p92 = scmp.ne.s32.totalorder %s80, %s81
    %p93 = scmp.eq.s32.totalorder %s15, 2
    %p94 = por %p92, %p93
    %p96 = scmp.ne.s32.totalorder %s81, %s95
    %p97 = scmp.eq.s32.totalorder %s15, 0
    %p98 = por %p96, %p97
    %s99 = ssub.s32 %s16, %s28
    %p100 = scmp.eq.s32.totalorder %s99, 0
    %s102 = sadd.s32 %s101, 1
    %s103 = scalar_select %p100, %s101, %s102
    %p106 = pneg %p100
    %p107 = scmp.eq.s32.totalorder %s9, 2
    %p108 = por %p106, %p107
    %p109 = scmp.ne.s32.totalorder %s101, %s104
    %p110 = scmp.eq.s32.totalorder %s9, 0
    %p111 = por %p109, %p110
    %p112 = scmp.ne.s32.totalorder %s101, %s104
    %p113 = scmp.eq.s32.totalorder %s14, 2
    %p114 = por %p112, %p113
    %p115 = scmp.ne.s32.totalorder %s104, %s105
    %p116 = scmp.eq.s32.totalorder %s14, 0
    %p117 = por %p115, %p116
    %p118 = scmp.ne.s32.totalorder %s104, %s105
    %p119 = scmp.eq.s32.totalorder %s15, 2
    %p120 = por %p118, %p119
    %p122 = scmp.ne.s32.totalorder %s105, %s121
    %p123 = scmp.eq.s32.totalorder %s15, 0
    %p124 = por %p122, %p123
    %p125 = scmp.le.s32.totalorder 1, %s9
    %p126 = scmp.lt.s32.totalorder %s9, 4
    %p127 = pnand %p125, %p126
    %p128 = pneg %p127
    // Predicated region
    $region9: #{encoder_forward.5} parent=5 // pred_check
      _
    $region10: #{encoder_forward.5} parent=5 // pred_check_branch
      %130 = sbr.rel (%p127) target = $region12
    $region11: #{encoder_forward.5} parent=5 // pred_region
      %s131 = ssub.s32 %s9, 1
      // Predicated region
      $region13: #{encoder_forward.5} parent=11 // pred_check
        %p132 = pneg %p70
      $region14: #{encoder_forward.5} parent=11 // pred_check_branch
        %134 = sbr.rel (%p132) target = $region16
      $region15: #{encoder_forward.5} parent=11 // pred_region
        _
      $region16: #{encoder_forward.5} parent=11 // pred_fallthru
        _
      // Predicated region
      $region17: #{encoder_forward.5} parent=11 // pred_check
        %p135 = pneg %p91
      $region18: #{encoder_forward.5} parent=11 // pred_check_branch
        %137 = sbr.rel (%p135) target = $region20
      $region19: #{encoder_forward.5} parent=11 // pred_region
        _
      $region20: #{encoder_forward.5} parent=11 // pred_fallthru
        _
    $region12: #{encoder_forward.5} parent=5 // pred_fallthru
      _
    %p138 = scmp.lt.s32.totalorder %s9, 3
    // Predicated region
    $region21: #{encoder_forward.5} parent=5 // pred_check
      %p139 = pneg %p138
    $region22: #{encoder_forward.5} parent=5 // pred_check_branch
      %141 = sbr.rel (%p139) target = $region24
    $region23: #{encoder_forward.5} parent=5 // pred_region
      // Predicated region
      $region25: #{encoder_forward.5} parent=23 // pred_check
        %p142 = pneg %p43
      $region26: #{encoder_forward.5} parent=23 // pred_check_branch
        %144 = sbr.rel (%p142) target = $region28
      $region27: #{encoder_forward.5} parent=23 // pred_region
        %s145 = smul.u32 16, %s16
        %s146 = smul.u32 3, %s17
        %p147 = scmp.lt.s32.totalorder %s145, 47
        %s148 = scalar_select %p147, %s145, 47
        %p149 = scmp.lt.s32.totalorder %s146, 2
        %s150 = scalar_select %p149, %s146, 2
        %s151 = smul.addr %s148, 3
        %s152 = sadd.s32 %s150, %s151
        %s153 = smul.addr %s152, 4
        %s154 = scalar_lea.vmem %s0, %s153
        %s155 = smul.u32 16, %s16
        %s156 = smul.u32 3, %s17
      $region28: #{encoder_forward.5} parent=23 // pred_fallthru
        _
    $region24: #{encoder_forward.5} parent=5 // pred_fallthru
      _
    %p157 = scmp.le.s32.totalorder 1, %s9
    %p158 = scmp.lt.s32.totalorder %s9, 4
    %p159 = pnand %p157, %p158
    %p160 = pneg %p159
    // Predicated region
    $region29: #{encoder_forward.5} parent=5 // pred_check
      _
    $region30: #{encoder_forward.5} parent=5 // pred_check_branch
      %162 = sbr.rel (%p159) target = $region32
    $region31: #{encoder_forward.5} parent=5 // pred_region
      %s163 = ssub.s32 %s9, 1
      %s164 = smul.u32 16, %s18
      %s165 = smul.u32 3, %s19
      %p166 = scmp.lt.s32.totalorder %s164, 47
      %s167 = scalar_select %p166, %s164, 47
      %p168 = scmp.lt.s32.totalorder %s165, 2
      %s169 = scalar_select %p168, %s165, 2
      %s170 = smul.addr %s167, 3
      %s171 = sadd.s32 %s169, %s170
      %s172 = smul.addr %s171, 4
      %s173 = scalar_lea.vmem %s0, %s172
      %p174 = pneg %p49
      %p175 = pneg %p46
      %p176 = pneg %p70
      %p177 = pneg %p67
      %p178 = pneg %p91
      %p179 = pneg %p88
      %p180 = pneg %p117
      %p181 = pneg %p114
      %s182 = smul.u32 16, %s18
      %p183 = scmp.lt.s32.totalorder %s182, 47
      %s184 = scalar_select %p183, %s182, 47
      %s185 = smul.addr %s184, 8
      %s186 = scalar_lea.vmem %s3, %s185
      %s187 = smul.u32 16, %s18
      %s188 = smul.u32 3, %s19
      %p189 = scmp.lt.s32.totalorder %s187, 47
      %s190 = scalar_select %p189, %s187, 47
      %p191 = scmp.lt.s32.totalorder %s188, 2
      %s192 = scalar_select %p191, %s188, 2
      %s193 = smul.addr %s190, 3
      %s194 = sadd.s32 %s192, %s193
      %s195 = smul.addr %s194, 4
      %s196 = scalar_lea.vmem %s0, %s195
      %s197 = smul.u32 16, %s18
      %s198 = smul.u32 3, %s19
      %s199 = smul.u32 16, %s18
      %p200 = scmp.lt.s32.totalorder %s199, 47
      %s201 = scalar_select %p200, %s199, 47
      %s202 = smul.addr %s201, 8
      %s203 = scalar_lea.vmem %s3, %s202
      %s204 = smul.u32 16, %s18
      %p205 = scmp.eq.s32.totalorder %s19, 0
      // Predicated region
      $region33: #{encoder_forward.5} parent=31 // pred_check
        %p206 = pneg %p205
      $region34: #{encoder_forward.5} parent=31 // pred_check_branch
        %208 = sbr.rel (%p206) target = $region36
      $region35: #{encoder_forward.5} parent=31 // pred_region
        %209 = vst [vmem:[#allocation2] sm:$0xff] 0.0
        %210 = vst [vmem:[#allocation2 + $0x8] sm:$0xff] 0.0
        %211 = vst [vmem:[#allocation2 + $0x10] sm:$0xff] 0.0
        %212 = vst [vmem:[#allocation2 + $0x18] sm:$0xff] 0.0
        %213 = vst [vmem:[#allocation2 + $0x20] sm:$0xff] 0.0
        %214 = vst [vmem:[#allocation2 + $0x28] sm:$0xff] 0.0
        %215 = vst [vmem:[#allocation2 + $0x30] sm:$0xff] 0.0
        %216 = vst [vmem:[#allocation2 + $0x38] sm:$0xff] 0.0
        %217 = vst [vmem:[#allocation2 + $0x40] sm:$0xff] 0.0
        %218 = vst [vmem:[#allocation2 + $0x48] sm:$0xff] 0.0
        %219 = vst [vmem:[#allocation2 + $0x50] sm:$0xff] 0.0
        %220 = vst [vmem:[#allocation2 + $0x58] sm:$0xff] 0.0
        %221 = vst [vmem:[#allocation2 + $0x60] sm:$0xff] 0.0
        %222 = vst [vmem:[#allocation2 + $0x68] sm:$0xff] 0.0
        %223 = vst [vmem:[#allocation2 + $0x70] sm:$0xff] 0.0
        %224 = vst [vmem:[#allocation2 + $0x78] sm:$0xff] 0.0
      $region36: #{encoder_forward.5} parent=31 // pred_fallthru
        _
      %v225 = vld [vmem:[#allocation2] sm:$0xff]
      %v226 = vld [vmem:[#allocation2 + $0x8] sm:$0xff]
      %v227 = vld [vmem:[#allocation2 + $0x10] sm:$0xff]
      %v228 = vld [vmem:[#allocation2 + $0x18] sm:$0xff]
      %v229 = vld [vmem:[#allocation2 + $0x20] sm:$0xff]
      %v230 = vld [vmem:[#allocation2 + $0x28] sm:$0xff]
      %v231 = vld [vmem:[#allocation2 + $0x30] sm:$0xff]
      %v232 = vld [vmem:[#allocation2 + $0x38] sm:$0xff]
      %v233 = vld [vmem:[#allocation2 + $0x40] sm:$0xff]
      %v234 = vld [vmem:[#allocation2 + $0x48] sm:$0xff]
      %v235 = vld [vmem:[#allocation2 + $0x50] sm:$0xff]
      %v236 = vld [vmem:[#allocation2 + $0x58] sm:$0xff]
      %v237 = vld [vmem:[#allocation2 + $0x60] sm:$0xff]
      %v238 = vld [vmem:[#allocation2 + $0x68] sm:$0xff]
      %v239 = vld [vmem:[#allocation2 + $0x70] sm:$0xff]
      %v240 = vld [vmem:[#allocation2 + $0x78] sm:$0xff]
      %v241 = vld [vmem:[%s196] sm:$0xff]
      %v242 = vld [vmem:[%s196 + $0x8] sm:$0xf]
      %v243 = vld [vmem:[%s196 + $0xc] sm:$0xff]
      %v244 = vld [vmem:[%s196 + $0x14] sm:$0xf]
      %v245 = vld [vmem:[%s196 + $0x18] sm:$0xff]
      %v246 = vld [vmem:[%s196 + $0x20] sm:$0xf]
      %v247 = vld [vmem:[%s196 + $0x24] sm:$0xff]
      %v248 = vld [vmem:[%s196 + $0x2c] sm:$0xf]
      %v249 = vld [vmem:[%s196 + $0x30] sm:$0xff]
      %v250 = vld [vmem:[%s196 + $0x38] sm:$0xf]
      %v251 = vld [vmem:[%s196 + $0x3c] sm:$0xff]
      %v252 = vld [vmem:[%s196 + $0x44] sm:$0xf]
      %v253 = vld [vmem:[%s196 + $0x48] sm:$0xff]
      %v254 = vld [vmem:[%s196 + $0x50] sm:$0xf]
      %v255 = vld [vmem:[%s196 + $0x54] sm:$0xff]
      %v256 = vld [vmem:[%s196 + $0x5c] sm:$0xf]
      %v257 = vld [vmem:[%s196 + $0x60] sm:$0xff]
      %v258 = vld [vmem:[%s196 + $0x68] sm:$0xf]
      %v259 = vld [vmem:[%s196 + $0x6c] sm:$0xff]
      %v260 = vld [vmem:[%s196 + $0x74] sm:$0xf]
      %v261 = vld [vmem:[%s196 + $0x78] sm:$0xff]
      %v262 = vld [vmem:[%s196 + $0x80] sm:$0xf]
      %v263 = vld [vmem:[%s196 + $0x84] sm:$0xff]
      %v264 = vld [vmem:[%s196 + $0x8c] sm:$0xf]
      %v265 = vld [vmem:[%s196 + $0x90] sm:$0xff]
      %v266 = vld [vmem:[%s196 + $0x98] sm:$0xf]
      %v267 = vld [vmem:[%s196 + $0x9c] sm:$0xff]
      %v268 = vld [vmem:[%s196 + $0xa4] sm:$0xf]
      %v269 = vld [vmem:[%s196 + $0xa8] sm:$0xff]
      %v270 = vld [vmem:[%s196 + $0xb0] sm:$0xf]
      %v271 = vld [vmem:[%s196 + $0xb4] sm:$0xff]
      %v272 = vld [vmem:[%s196 + $0xbc] sm:$0xf]
      %v273 = vld [vmem:[%s1] sm:$0xf]
      %v274 = vld [vmem:[%s1 + $0x4] sm:$0xf]
      %v275 = vld [vmem:[%s1 + $0x8] sm:$0xf]
      %v276 = vld [vmem:[%s1 + $0xc] sm:$0xf]
      %v277 = vld [vmem:[%s1 + $0x10] sm:$0xf]
      %v278 = vld [vmem:[%s1 + $0x14] sm:$0xf]
      %v279 = vld [vmem:[%s1 + $0x18] sm:$0xf]
      %v280 = vld [vmem:[%s1 + $0x1c] sm:$0xf]
      %v281 = vld [vmem:[%s1 + $0x20] sm:$0xf]
      %v282 = vld [vmem:[%s1 + $0x24] sm:$0xf]
      %v283 = vld [vmem:[%s1 + $0x28] sm:$0xf]
      %v284 = vld [vmem:[%s1 + $0x2c] sm:$0xf]
      %v285 = vld [vmem:[%s1 + $0x30] sm:$0xf]
      %v286 = vld [vmem:[%s1 + $0x34] sm:$0xf]
      %v287 = vld [vmem:[%s1 + $0x38] sm:$0xf]
      %v288 = vld [vmem:[%s1 + $0x3c] sm:$0xf]
      %v289 = vld [vmem:[%s1 + $0x40] sm:$0xf]
      %v290 = vld [vmem:[%s1 + $0x44] sm:$0xf]
      %v291 = vld [vmem:[%s1 + $0x48] sm:$0xf]
      %v292 = vld [vmem:[%s1 + $0x4c] sm:$0xf]
      %v293 = vld [vmem:[%s1 + $0x50] sm:$0xf]
      %v294 = vld [vmem:[%s1 + $0x54] sm:$0xf]
      %v295 = vld [vmem:[%s1 + $0x58] sm:$0xf]
      %v296 = vld [vmem:[%s1 + $0x5c] sm:$0xf]
      %v297 = vld [vmem:[%s1 + $0x60] sm:$0xf]
      %v298 = vld [vmem:[%s1 + $0x64] sm:$0xf]
      %v299 = vld [vmem:[%s1 + $0x68] sm:$0xf]
      %v300 = vld [vmem:[%s1 + $0x6c] sm:$0xf]
      %v301 = vld [vmem:[%s1 + $0x70] sm:$0xf]
      %v302 = vld [vmem:[%s1 + $0x74] sm:$0xf]
      %v303 = vld [vmem:[%s1 + $0x78] sm:$0xf]
      %v304 = vld [vmem:[%s1 + $0x7c] sm:$0xf]
      %v305 = vld [vmem:[%s1 + $0x80] sm:$0xf]
      %v306 = vld [vmem:[%s1 + $0x84] sm:$0xf]
      %v307 = vld [vmem:[%s1 + $0x88] sm:$0xf]
      %v308 = vld [vmem:[%s1 + $0x8c] sm:$0xf]
      %v309 = vld [vmem:[%s1 + $0x90] sm:$0xf]
      %v310 = vld [vmem:[%s1 + $0x94] sm:$0xf]
      %v311 = vld [vmem:[%s1 + $0x98] sm:$0xf]
      %v312 = vld [vmem:[%s1 + $0x9c] sm:$0xf]
      %v313 = vld [vmem:[%s1 + $0xa0] sm:$0xf]
      %v314 = vld [vmem:[%s1 + $0xa4] sm:$0xf]
      %v315 = vld [vmem:[%s1 + $0xa8] sm:$0xf]
      %v316 = vld [vmem:[%s1 + $0xac] sm:$0xf]
      %v317 = vld [vmem:[%s1 + $0xb0] sm:$0xf]
      %v318 = vld [vmem:[%s1 + $0xb4] sm:$0xf]
      %v319 = vld [vmem:[%s1 + $0xb8] sm:$0xf]
      %v320 = vld [vmem:[%s1 + $0xbc] sm:$0xf]
      %v353 = vunpack.c.l.b16 %v241
      %v354 = vunpack.c.h.b16 %v241
      %v355 = vunpack.c.l.b16 %v242
      %v356 = vunpack.c.l.b16 %v243
      %v357 = vunpack.c.h.b16 %v243
      %v358 = vunpack.c.l.b16 %v244
      %v359 = vunpack.c.l.b16 %v245
      %v360 = vunpack.c.h.b16 %v245
      %v361 = vunpack.c.l.b16 %v246
      %v362 = vunpack.c.l.b16 %v247
      %v363 = vunpack.c.h.b16 %v247
      %v364 = vunpack.c.l.b16 %v248
      %v365 = vunpack.c.l.b16 %v249
      %v366 = vunpack.c.h.b16 %v249
      %v367 = vunpack.c.l.b16 %v250
      %v368 = vunpack.c.l.b16 %v251
      %v369 = vunpack.c.h.b16 %v251
      %v370 = vunpack.c.l.b16 %v252
      %v371 = vunpack.c.l.b16 %v253
      %v372 = vunpack.c.h.b16 %v253
      %v373 = vunpack.c.l.b16 %v254
      %v374 = vunpack.c.l.b16 %v255
      %v375 = vunpack.c.h.b16 %v255
      %v376 = vunpack.c.l.b16 %v256
      %v377 = vunpack.c.l.b16 %v257
      %v378 = vunpack.c.h.b16 %v257
      %v379 = vunpack.c.l.b16 %v258
      %v380 = vunpack.c.l.b16 %v259
      %v381 = vunpack.c.h.b16 %v259
      %v382 = vunpack.c.l.b16 %v260
      %v383 = vunpack.c.l.b16 %v261
      %v384 = vunpack.c.h.b16 %v261
      %v385 = vunpack.c.l.b16 %v262
      %v386 = vunpack.c.l.b16 %v263
      %v387 = vunpack.c.h.b16 %v263
      %v388 = vunpack.c.l.b16 %v264
      %v389 = vunpack.c.l.b16 %v265
      %v390 = vunpack.c.h.b16 %v265
      %v391 = vunpack.c.l.b16 %v266
      %v392 = vunpack.c.l.b16 %v267
      %v393 = vunpack.c.h.b16 %v267
      %v394 = vunpack.c.l.b16 %v268
      %v395 = vunpack.c.l.b16 %v269
      %v396 = vunpack.c.h.b16 %v269
      %v397 = vunpack.c.l.b16 %v270
      %v398 = vunpack.c.l.b16 %v271
      %v399 = vunpack.c.h.b16 %v271
      %v400 = vunpack.c.l.b16 %v272
      %v401 = vpack.c.b16 %v356, %v353
      %v402 = vpack.c.b16 %v357, %v354
      %v403 = vpack.c.b16 %v358, %v355
      %v404 = vpack.c.b16 %v362, %v359
      %v405 = vpack.c.b16 %v363, %v360
      %v406 = vpack.c.b16 %v364, %v361
      %v407 = vpack.c.b16 %v368, %v365
      %v408 = vpack.c.b16 %v369, %v366
      %v409 = vpack.c.b16 %v370, %v367
      %v410 = vpack.c.b16 %v374, %v371
      %v411 = vpack.c.b16 %v375, %v372
      %v412 = vpack.c.b16 %v376, %v373
      %v413 = vpack.c.b16 %v380, %v377
      %v414 = vpack.c.b16 %v381, %v378
      %v415 = vpack.c.b16 %v382, %v379
      %v416 = vpack.c.b16 %v386, %v383
      %v417 = vpack.c.b16 %v387, %v384
      %v418 = vpack.c.b16 %v388, %v385
      %v419 = vpack.c.b16 %v392, %v389
      %v420 = vpack.c.b16 %v393, %v390
      %v421 = vpack.c.b16 %v394, %v391
      %v422 = vpack.c.b16 %v398, %v395
      %v423 = vpack.c.b16 %v399, %v396
      %v424 = vpack.c.b16 %v400, %v397
      %v497 = vunpack.c.l.b16 %v273
      %v498 = vunpack.c.l.b16 %v274
      %v499 = vunpack.c.l.b16 %v275
      %v500 = vunpack.c.l.b16 %v276
      %v501 = vunpack.c.l.b16 %v277
      %v502 = vunpack.c.l.b16 %v278
      %v503 = vunpack.c.l.b16 %v279
      %v504 = vunpack.c.l.b16 %v280
      %v505 = vunpack.c.l.b16 %v281
      %v506 = vunpack.c.l.b16 %v282
      %v507 = vunpack.c.l.b16 %v283
      %v508 = vunpack.c.l.b16 %v284
      %v509 = vunpack.c.l.b16 %v285
      %v510 = vunpack.c.l.b16 %v286
      %v511 = vunpack.c.l.b16 %v287
      %v512 = vunpack.c.l.b16 %v288
      %v513 = vunpack.c.l.b16 %v289
      %v514 = vunpack.c.l.b16 %v290
      %v515 = vunpack.c.l.b16 %v291
      %v516 = vunpack.c.l.b16 %v292
      %v517 = vunpack.c.l.b16 %v293
      %v518 = vunpack.c.l.b16 %v294
      %v519 = vunpack.c.l.b16 %v295
      %v520 = vunpack.c.l.b16 %v296
      %v521 = vunpack.c.l.b16 %v297
      %v522 = vunpack.c.l.b16 %v298
      %v523 = vunpack.c.l.b16 %v299
      %v524 = vunpack.c.l.b16 %v300
      %v525 = vunpack.c.l.b16 %v301
      %v526 = vunpack.c.l.b16 %v302
      %v527 = vunpack.c.l.b16 %v303
      %v528 = vunpack.c.l.b16 %v304
      %v529 = vunpack.c.l.b16 %v305
      %v530 = vunpack.c.l.b16 %v306
      %v531 = vunpack.c.l.b16 %v307
      %v532 = vunpack.c.l.b16 %v308
      %v533 = vunpack.c.l.b16 %v309
      %v534 = vunpack.c.l.b16 %v310
      %v535 = vunpack.c.l.b16 %v311
      %v536 = vunpack.c.l.b16 %v312
      %v537 = vunpack.c.l.b16 %v313
      %v538 = vunpack.c.l.b16 %v314
      %v539 = vunpack.c.l.b16 %v315
      %v540 = vunpack.c.l.b16 %v316
      %v541 = vunpack.c.l.b16 %v317
      %v542 = vunpack.c.l.b16 %v318
      %v543 = vunpack.c.l.b16 %v319
      %v544 = vunpack.c.l.b16 %v320
      %v545 = vpack.c.b16 %v498, %v497
      %v546 = vpack.c.b16 %v500, %v499
      %v547 = vpack.c.b16 %v502, %v501
      %v548 = vpack.c.b16 %v504, %v503
      %v549 = vpack.c.b16 %v506, %v505
      %v550 = vpack.c.b16 %v508, %v507
      %v551 = vpack.c.b16 %v510, %v509
      %v552 = vpack.c.b16 %v512, %v511
      %v553 = vpack.c.b16 %v514, %v513
      %v554 = vpack.c.b16 %v516, %v515
      %v555 = vpack.c.b16 %v518, %v517
      %v556 = vpack.c.b16 %v520, %v519
      %v557 = vpack.c.b16 %v522, %v521
      %v558 = vpack.c.b16 %v524, %v523
      %v559 = vpack.c.b16 %v526, %v525
      %v560 = vpack.c.b16 %v528, %v527
      %v561 = vpack.c.b16 %v530, %v529
      %v562 = vpack.c.b16 %v532, %v531
      %v563 = vpack.c.b16 %v534, %v533
      %v564 = vpack.c.b16 %v536, %v535
      %v565 = vpack.c.b16 %v538, %v537
      %v566 = vpack.c.b16 %v540, %v539
      %v567 = vpack.c.b16 %v542, %v541
      %v568 = vpack.c.b16 %v544, %v543
      %593 = vmatpush.bf16.msra.mxu0 %v552
      %594 = vmatpush.bf16.msra.mxu0 %v551
      %595 = vmatpush.bf16.msra.mxu0 %v550
      %596 = vmatpush.bf16.msra.mxu0 %v549
      %597 = vmatpush.bf16.msra.mxu0 %v548
      %598 = vmatpush.bf16.msra.mxu0 %v547
      %599 = vmatpush.bf16.msra.mxu0 %v546
      %600 = vmatpush.bf16.msra.mxu0 %v545
      %601 = vmatmul.bf16.gmra.mxu0 %v401
      %v602 = vpop.f32.mrf.mxu0
      %v603 = vadd.f32 0.0, %v602
      %v604 = vpop.f32.mrf.mxu0
      %v605 = vadd.f32 0.0, %v604
      %606 = vmatmul.bf16.gmra.mxu0 %v404
      %v607 = vpop.f32.mrf.mxu0
      %v608 = vadd.f32 0.0, %v607
      %v609 = vpop.f32.mrf.mxu0
      %v610 = vadd.f32 0.0, %v609
      %611 = vmatmul.bf16.gmra.mxu0 %v407
      %v612 = vpop.f32.mrf.mxu0
      %v613 = vadd.f32 0.0, %v612
      %v614 = vpop.f32.mrf.mxu0
      %v615 = vadd.f32 0.0, %v614
      %616 = vmatmul.bf16.gmra.mxu0 %v410
      %v617 = vpop.f32.mrf.mxu0
      %v618 = vadd.f32 0.0, %v617
      %v619 = vpop.f32.mrf.mxu0
      %v620 = vadd.f32 0.0, %v619
      %621 = vmatmul.bf16.gmra.mxu0 %v413
      %v622 = vpop.f32.mrf.mxu0
      %v623 = vadd.f32 0.0, %v622
      %v624 = vpop.f32.mrf.mxu0
      %v625 = vadd.f32 0.0, %v624
      %626 = vmatmul.bf16.gmra.mxu0 %v416
      %v627 = vpop.f32.mrf.mxu0
      %v628 = vadd.f32 0.0, %v627
      %v629 = vpop.f32.mrf.mxu0
      %v630 = vadd.f32 0.0, %v629
      %631 = vmatmul.bf16.gmra.mxu0 %v419
      %v632 = vpop.f32.mrf.mxu0
      %v633 = vadd.f32 0.0, %v632
      %v634 = vpop.f32.mrf.mxu0
      %v635 = vadd.f32 0.0, %v634
      %636 = vmatmul.bf16.gmra.mxu0 %v422
      %v637 = vpop.f32.mrf.mxu0
      %v638 = vadd.f32 0.0, %v637
      %v639 = vpop.f32.mrf.mxu0
      %v640 = vadd.f32 0.0, %v639
      %641 = vdwg.mxu0
      %642 = vmatpush.bf16.msra.mxu0 %v560
      %643 = vmatpush.bf16.msra.mxu0 %v559
      %644 = vmatpush.bf16.msra.mxu0 %v558
      %645 = vmatpush.bf16.msra.mxu0 %v557
      %646 = vmatpush.bf16.msra.mxu0 %v556
      %647 = vmatpush.bf16.msra.mxu0 %v555
      %648 = vmatpush.bf16.msra.mxu0 %v554
      %649 = vmatpush.bf16.msra.mxu0 %v553
      %650 = vmatmul.bf16.gmra.mxu0 %v402
      %v651 = vpop.f32.mrf.mxu0
      %v652 = vadd.f32 %v603, %v651
      %v653 = vpop.f32.mrf.mxu0
      %v654 = vadd.f32 %v605, %v653
      %655 = vmatmul.bf16.gmra.mxu0 %v405
      %v656 = vpop.f32.mrf.mxu0
      %v657 = vadd.f32 %v608, %v656
      %v658 = vpop.f32.mrf.mxu0
      %v659 = vadd.f32 %v610, %v658
      %660 = vmatmul.bf16.gmra.mxu0 %v408
      %v661 = vpop.f32.mrf.mxu0
      %v662 = vadd.f32 %v613, %v661
      %v663 = vpop.f32.mrf.mxu0
      %v664 = vadd.f32 %v615, %v663
      %665 = vmatmul.bf16.gmra.mxu0 %v411
      %v666 = vpop.f32.mrf.mxu0
      %v667 = vadd.f32 %v618, %v666
      %v668 = vpop.f32.mrf.mxu0
      %v669 = vadd.f32 %v620, %v668
      %670 = vmatmul.bf16.gmra.mxu0 %v414
      %v671 = vpop.f32.mrf.mxu0
      %v672 = vadd.f32 %v623, %v671
      %v673 = vpop.f32.mrf.mxu0
      %v674 = vadd.f32 %v625, %v673
      %675 = vmatmul.bf16.gmra.mxu0 %v417
      %v676 = vpop.f32.mrf.mxu0
      %v677 = vadd.f32 %v628, %v676
      %v678 = vpop.f32.mrf.mxu0
      %v679 = vadd.f32 %v630, %v678
      %680 = vmatmul.bf16.gmra.mxu0 %v420
      %v681 = vpop.f32.mrf.mxu0
      %v682 = vadd.f32 %v633, %v681
      %v683 = vpop.f32.mrf.mxu0
      %v684 = vadd.f32 %v635, %v683
      %685 = vmatmul.bf16.gmra.mxu0 %v423
      %v686 = vpop.f32.mrf.mxu0
      %v687 = vadd.f32 %v638, %v686
      %v688 = vpop.f32.mrf.mxu0
      %v689 = vadd.f32 %v640, %v688
      %690 = vdwg.mxu0
      %691 = vmatpush.bf16.msra.mxu0 %v568
      %692 = vmatpush.bf16.msra.mxu0 %v567
      %693 = vmatpush.bf16.msra.mxu0 %v566
      %694 = vmatpush.bf16.msra.mxu0 %v565
      %695 = vmatpush.bf16.msra.mxu0 %v564
      %696 = vmatpush.bf16.msra.mxu0 %v563
      %697 = vmatpush.bf16.msra.mxu0 %v562
      %698 = vmatpush.bf16.msra.mxu0 %v561
      %699 = vmatmul.bf16.gmra.mxu0 %v403
      %v700 = vpop.f32.mrf.mxu0
      %v701 = vadd.f32 %v652, %v700
      %v702 = vpop.f32.mrf.mxu0
      %v703 = vadd.f32 %v654, %v702
      %704 = vmatmul.bf16.gmra.mxu0 %v406
      %v705 = vpop.f32.mrf.mxu0
      %v706 = vadd.f32 %v657, %v705
      %v707 = vpop.f32.mrf.mxu0
      %v708 = vadd.f32 %v659, %v707
      %709 = vmatmul.bf16.gmra.mxu0 %v409
      %v710 = vpop.f32.mrf.mxu0
      %v711 = vadd.f32 %v662, %v710
      %v712 = vpop.f32.mrf.mxu0
      %v713 = vadd.f32 %v664, %v712
      %714 = vmatmul.bf16.gmra.mxu0 %v412
      %v715 = vpop.f32.mrf.mxu0
      %v716 = vadd.f32 %v667, %v715
      %v717 = vpop.f32.mrf.mxu0
      %v718 = vadd.f32 %v669, %v717
      %719 = vmatmul.bf16.gmra.mxu0 %v415
      %v720 = vpop.f32.mrf.mxu0
      %v721 = vadd.f32 %v672, %v720
      %v722 = vpop.f32.mrf.mxu0
      %v723 = vadd.f32 %v674, %v722
      %724 = vmatmul.bf16.gmra.mxu0 %v418
      %v725 = vpop.f32.mrf.mxu0
      %v726 = vadd.f32 %v677, %v725
      %v727 = vpop.f32.mrf.mxu0
      %v728 = vadd.f32 %v679, %v727
      %729 = vmatmul.bf16.gmra.mxu0 %v421
      %v730 = vpop.f32.mrf.mxu0
      %v731 = vadd.f32 %v682, %v730
      %v732 = vpop.f32.mrf.mxu0
      %v733 = vadd.f32 %v684, %v732
      %734 = vmatmul.bf16.gmra.mxu0 %v424
      %v735 = vpop.f32.mrf.mxu0
      %v736 = vadd.f32 %v687, %v735
      %v737 = vpop.f32.mrf.mxu0
      %v738 = vadd.f32 %v689, %v737
      %739 = vdwg.mxu0
      %v740 = vadd.f32 %v225, %v701
      %v741 = vadd.f32 %v226, %v703
      %v742 = vadd.f32 %v227, %v706
      %v743 = vadd.f32 %v228, %v708
      %v744 = vadd.f32 %v229, %v711
      %v745 = vadd.f32 %v230, %v713
      %v746 = vadd.f32 %v231, %v716
      %v747 = vadd.f32 %v232, %v718
      %v748 = vadd.f32 %v233, %v721
      %v749 = vadd.f32 %v234, %v723
      %v750 = vadd.f32 %v235, %v726
      %v751 = vadd.f32 %v236, %v728
      %v752 = vadd.f32 %v237, %v731
      %v753 = vadd.f32 %v238, %v733
      %v754 = vadd.f32 %v239, %v736
      %v755 = vadd.f32 %v240, %v738
      %756 = vst [vmem:[#allocation2] sm:$0xff] %v740
      %757 = vst [vmem:[#allocation2 + $0x8] sm:$0xff] %v741
      %758 = vst [vmem:[#allocation2 + $0x10] sm:$0xff] %v742
      %759 = vst [vmem:[#allocation2 + $0x18] sm:$0xff] %v743
      %760 = vst [vmem:[#allocation2 + $0x20] sm:$0xff] %v744
      %761 = vst [vmem:[#allocation2 + $0x28] sm:$0xff] %v745
      %762 = vst [vmem:[#allocation2 + $0x30] sm:$0xff] %v746
      %763 = vst [vmem:[#allocation2 + $0x38] sm:$0xff] %v747
      %764 = vst [vmem:[#allocation2 + $0x40] sm:$0xff] %v748
      %765 = vst [vmem:[#allocation2 + $0x48] sm:$0xff] %v749
      %766 = vst [vmem:[#allocation2 + $0x50] sm:$0xff] %v750
      %767 = vst [vmem:[#allocation2 + $0x58] sm:$0xff] %v751
      %768 = vst [vmem:[#allocation2 + $0x60] sm:$0xff] %v752
      %769 = vst [vmem:[#allocation2 + $0x68] sm:$0xff] %v753
      %770 = vst [vmem:[#allocation2 + $0x70] sm:$0xff] %v754
      %771 = vst [vmem:[#allocation2 + $0x78] sm:$0xff] %v755
      // Predicated region
      $region37: #{encoder_forward.5} parent=31 // pred_check
        %p772 = pneg %p205
      $region38: #{encoder_forward.5} parent=31 // pred_check_branch
        %774 = sbr.rel (%p772) target = $region40
      $region39: #{encoder_forward.5} parent=31 // pred_region
        %v775 = vld [vmem:[#allocation2] sm:$0xff]
        %v776 = vld [vmem:[#allocation2 + $0x8] sm:$0xff]
        %v777 = vld [vmem:[#allocation2 + $0x10] sm:$0xff]
        %v778 = vld [vmem:[#allocation2 + $0x18] sm:$0xff]
        %v779 = vld [vmem:[#allocation2 + $0x20] sm:$0xff]
        %v780 = vld [vmem:[#allocation2 + $0x28] sm:$0xff]
        %v781 = vld [vmem:[#allocation2 + $0x30] sm:$0xff]
        %v782 = vld [vmem:[#allocation2 + $0x38] sm:$0xff]
        %v783 = vld [vmem:[#allocation2 + $0x40] sm:$0xff]
        %v784 = vld [vmem:[#allocation2 + $0x48] sm:$0xff]
        %v785 = vld [vmem:[#allocation2 + $0x50] sm:$0xff]
        %v786 = vld [vmem:[#allocation2 + $0x58] sm:$0xff]
        %v787 = vld [vmem:[#allocation2 + $0x60] sm:$0xff]
        %v788 = vld [vmem:[#allocation2 + $0x68] sm:$0xff]
        %v789 = vld [vmem:[#allocation2 + $0x70] sm:$0xff]
        %v790 = vld [vmem:[#allocation2 + $0x78] sm:$0xff]
        %v791 = vld [vmem:[%s2] sm:$0x1]
        %v793 = vperm.slane %v791, 0
        %v795 = vadd.f32 %v775, %v793
        %v796 = vadd.f32 %v776, %v793
        %v797 = vadd.f32 %v777, %v793
        %v798 = vadd.f32 %v778, %v793
        %v799 = vadd.f32 %v779, %v793
        %v800 = vadd.f32 %v780, %v793
        %v801 = vadd.f32 %v781, %v793
        %v802 = vadd.f32 %v782, %v793
        %v803 = vadd.f32 %v783, %v793
        %v804 = vadd.f32 %v784, %v793
        %v805 = vadd.f32 %v785, %v793
        %v806 = vadd.f32 %v786, %v793
        %v807 = vadd.f32 %v787, %v793
        %v808 = vadd.f32 %v788, %v793
        %v809 = vadd.f32 %v789, %v793
        %v810 = vadd.f32 %v790, %v793
        %811 = vst [vmem:[%s203] sm:$0xff] %v795
        %812 = vst [vmem:[%s203 + $0x8] sm:$0xff] %v796
        %813 = vst [vmem:[%s203 + $0x10] sm:$0xff] %v797
        %814 = vst [vmem:[%s203 + $0x18] sm:$0xff] %v798
        %815 = vst [vmem:[%s203 + $0x20] sm:$0xff] %v799
        %816 = vst [vmem:[%s203 + $0x28] sm:$0xff] %v800
        %817 = vst [vmem:[%s203 + $0x30] sm:$0xff] %v801
        %818 = vst [vmem:[%s203 + $0x38] sm:$0xff] %v802
        %819 = vst [vmem:[%s203 + $0x40] sm:$0xff] %v803
        %820 = vst [vmem:[%s203 + $0x48] sm:$0xff] %v804
        %821 = vst [vmem:[%s203 + $0x50] sm:$0xff] %v805
        %822 = vst [vmem:[%s203 + $0x58] sm:$0xff] %v806
        %823 = vst [vmem:[%s203 + $0x60] sm:$0xff] %v807
        %824 = vst [vmem:[%s203 + $0x68] sm:$0xff] %v808
        %825 = vst [vmem:[%s203 + $0x70] sm:$0xff] %v809
        %826 = vst [vmem:[%s203 + $0x78] sm:$0xff] %v810
      $region40: #{encoder_forward.5} parent=31 // pred_fallthru
        _
      %s827 = smul.u32 16, %s18
      %p828 = scmp.lt.s32.totalorder %s827, 47
      %s829 = scalar_select %p828, %s827, 47
      %s830 = smul.addr %s829, 8
      %s831 = scalar_lea.vmem %s3, %s830
      // Predicated region
      $region41: #{encoder_forward.5} parent=31 // pred_check
        %p832 = pneg %p114
      $region42: #{encoder_forward.5} parent=31 // pred_check_branch
        %834 = sbr.rel (%p832) target = $region44
      $region43: #{encoder_forward.5} parent=31 // pred_region
        %s835 = smul.u32 16, %s18
      $region44: #{encoder_forward.5} parent=31 // pred_fallthru
        _
    $region32: #{encoder_forward.5} parent=5 // pred_fallthru
      _
    %p836 = scmp.le.s32.totalorder 2, %s9
    // Predicated region
    $region45: #{encoder_forward.5} parent=5 // pred_check
      %p837 = pneg %p836
    $region46: #{encoder_forward.5} parent=5 // pred_check_branch
      %839 = sbr.rel (%p837) target = $region48
    $region47: #{encoder_forward.5} parent=5 // pred_region
      %s840 = ssub.s32 %s9, 2
      // Predicated region
      $region49: #{encoder_forward.5} parent=47 // pred_check
        %p841 = pneg %p120
      $region50: #{encoder_forward.5} parent=47 // pred_check_branch
        %843 = sbr.rel (%p841) target = $region52
      $region51: #{encoder_forward.5} parent=47 // pred_region
        %s844 = smul.u32 16, %s20
        %p845 = scmp.lt.s32.totalorder %s844, 47
        %s846 = scalar_select %p845, %s844, 47
        %s847 = smul.addr %s846, 8
        %s848 = scalar_lea.vmem %s3, %s847
      $region52: #{encoder_forward.5} parent=47 // pred_fallthru
        _
    $region48: #{encoder_forward.5} parent=5 // pred_fallthru
      _
  $region6: #{encoder_forward.5} parent=0 // loop_footer
    %s13 = sadd.s32 1, %s9
  $region7: #{encoder_forward.5} parent=0 // loop_footer_branch
    %8 = sbr.rel target = $region3
  $region8: #{encoder_forward.5} parent=0 // loop_exit
    _

</llo_original>
